<compile_context>
chip_gen: v6e
topology: v6e:2x2x1
jax: 0.10.0
libtpu: 0.0.40
codegen_flags: <defaults>
</compile_context>

<pallas_src>
import numpy as np
import jax
import jax.numpy as jnp
from jax.experimental import pallas as pl
from jax.experimental.pallas import tpu as pltpu

EMBED = 128          # embed_size
HIDDEN = 256         # hidden_size
LAMBDA = 0.01        # sparsity_threshold (softshrink lambda)
SCALE = 0.02
LEAKY_SLOPE = 0.01   # nn.LeakyReLU default negative_slope
VMEM_LIMIT = 48 * 1024 * 1024   # explicit scoped-VMEM request (< v7x 64 MiB phys)


def _round_up(x, m):
    return (x + m - 1) // m * m


def _const_spec(shape):
    """BlockSpec for an array kept fully resident (constant block index)."""
    return pl.BlockSpec(shape, lambda *_: (0,) * len(shape))


def _build_dft_mats(N, T):
    """Real matrices reproducing ortho rfft2 / irfft2 over an (N, T) grid.

    Built by probing unit basis vectors with numpy FFTs at trace time.  Both
    rfft2 and irfft2 are real-linear in the (Re, Im) components, so applying
    these matrices reproduces torch.fft.rfft2 / irfft2 (norm='ortho') exactly,
    including the treatment of non-Hermitian-consistent bins produced by the
    FreMLP nonlinearity.
    """
    M = N * T
    Fh = T // 2 + 1
    F = N * Fh
    eye = np.eye(M, dtype=np.float64).reshape(M, N, T)
    fwd = np.fft.rfft2(eye, axes=(-2, -1), norm="ortho").reshape(M, F)
    wrt = np.ascontiguousarray(fwd.real.T).astype(np.float32)    # (F, M)
    wit = np.ascontiguousarray(fwd.imag.T).astype(np.float32)    # (F, M)
    eyef = np.eye(F, dtype=np.float64).reshape(F, N, Fh)
    inv_r = np.fft.irfft2(eyef, s=(N, T), axes=(-2, -1),
                          norm="ortho").reshape(F, M)
    inv_i = np.fft.irfft2(1j * eyef, s=(N, T), axes=(-2, -1),
                          norm="ortho").reshape(F, M)
    irm = np.ascontiguousarray(inv_r.T).astype(np.float32)       # (M, F)
    iim = np.ascontiguousarray(inv_i.T).astype(np.float32)       # (M, F)
    return wrt, wit, irm, iim


# ------------------------------------------------------------------
# Fused frequency-domain kernel:
#   tokenEmb -> rfft2 (DFT matmul) -> FreMLP (diag scale + bias + ReLU +
#   softshrink, fused) -> irfft2 (DFT matmul)
# ------------------------------------------------------------------
def freq_mlp_pallas(x2, emb, wrt, wit, irm, iim, fparams):
    """x2:(B, N*T)  emb:(1,D)  wrt/wit:(F,M)  irm/iim:(M,F)  fparams:(4,D)
    returns xt:(B, N*T, D) == irfft2(FreMLP(rfft2(tokenEmb(x))))."""
    B, M = x2.shape
    F = wrt.shape[0]
    D = emb.shape[1]
    bt = B if B <= 8 else 8               # batch tile: full B or 8-aligned
    grid = (pl.cdiv(B, bt),)              # ragged last block handled by Pallas

    def kernel(x_ref, emb_ref, wrt_ref, wit_ref, ir_ref, ii_ref, fp_ref, o_ref):
        embv = emb_ref[...]               # (1, D)
        wr = wrt_ref[...]                 # (F, M)
        wi = wit_ref[...]                 # (F, M)
        ir = ir_ref[...]                  # (M, F)
        ii = ii_ref[...]                  # (M, F)
        rd = fp_ref[0:1, :]               # diag(r2)  (1, D)
        idg = fp_ref[1:2, :]              # diag(i2)  (1, D)
        rb = fp_ref[2:3, :]               # rb2       (1, D)
        ib = fp_ref[3:4, :]               # ib2       (1, D)
        xb = x_ref[...]                   # (bt, M)
        for i in range(bt):               # static unroll, bt <= 8
            xe = xb[i][:, None] * embv                                  # tokenEmb (M, D)
            xr = jnp.dot(wr, xe, preferred_element_type=jnp.float32)    # Re rfft2 (F, D)
            xi = jnp.dot(wi, xe, preferred_element_type=jnp.float32)    # Im rfft2 (F, D)
            # FreMLP; softshrink(relu(z), LAMBDA) == max(z - LAMBDA, 0) exactly
            yr = jnp.maximum(xr * rd - xi * idg + rb - LAMBDA, 0.0)
            yi = jnp.maximum(xi * rd + xr * idg + ib - LAMBDA, 0.0)
            # irfft2 back to the (N*T, D) real signal
            o_ref[i] = (jnp.dot(ir, yr, preferred_element_type=jnp.float32)
                        + jnp.dot(ii, yi, preferred_element_type=jnp.float32))

    return pl.pallas_call(
        kernel,
        grid=grid,
        in_specs=[pl.BlockSpec((bt, M), lambda b: (b, 0)),
                  _const_spec((1, D)),
                  _const_spec((F, M)),
                  _const_spec((F, M)),
                  _const_spec((M, F)),
                  _const_spec((M, F)),
                  _const_spec((4, D))],
        out_specs=pl.BlockSpec((bt, M, D), lambda b: (b, 0, 0)),
        out_shape=jax.ShapeDtypeStruct((B, M, D), jnp.float32),
        compiler_params=pltpu.CompilerParams(
            dimension_semantics=("parallel",),
            vmem_limit_bytes=VMEM_LIMIT),
    )(x2, emb, wrt, wit, irm, iim, fparams)


# ------------------------------------------------------------------
# Fused FC head: Linear(T*D -> H) -> LeakyReLU -> Linear(H -> pred_len)
# Row-tiled over M = B*N (parallel grid axis), lane-dense padded output.
# ------------------------------------------------------------------
def fc_pallas(x, w1, b1, w2, b2):
    Mfc, K = x.shape
    H = w1.shape[1]
    P = w2.shape[1]
    Pp = _round_up(P, 128)                         # lane-dense output stores
    w2p = jnp.pad(w2, ((0, 0), (0, Pp - P)))
    b2p = jnp.pad(b2.reshape(1, P), ((0, 0), (0, Pp - P)))
    tm = Mfc if Mfc <= 256 else 256                # row tile (8-aligned or full)
    grid = (pl.cdiv(Mfc, tm),)

    # TODO(synk): add a K-reduction grid axis + f32 VMEM accumulator when
    # K = seq_len*EMBED grows large enough that w1 / the x tile stress VMEM.
    def kernel(x_ref, w1_ref, b1_ref, w2_ref, b2_ref, o_ref):
        h = jnp.dot(x_ref[...], w1_ref[...],
                    preferred_element_type=jnp.float32) + b1_ref[...]
        h = jnp.where(h >= 0.0, h, LEAKY_SLOPE * h)            # LeakyReLU
        o_ref[...] = jnp.dot(h, w2_ref[...],
                             preferred_element_type=jnp.float32) + b2_ref[...]

    out = pl.pallas_call(
        kernel,
        grid=grid,
        in_specs=[pl.BlockSpec((tm, K), lambda i: (i, 0)),
                  _const_spec((K, H)),
                  _const_spec((1, H)),
                  _const_spec((H, Pp)),
                  _const_spec((1, Pp))],
        out_specs=pl.BlockSpec((tm, Pp), lambda i: (i, 0)),
        out_shape=jax.ShapeDtypeStruct((Mfc, Pp), jnp.float32),
        compiler_params=pltpu.CompilerParams(
            dimension_semantics=("parallel",),
            vmem_limit_bytes=VMEM_LIMIT),
    )(x, w1, b1.reshape(1, H), w2p, b2p)
    return out[:, :P]


# ------------------------------------------------------------------
# Full forward pass
# ------------------------------------------------------------------
def model2_forward(x, params, pred_len):
    B, T, N = x.shape
    D = EMBED
    M = N * T

    # Ortho-DFT matrices: numpy at trace time -> compile-time constants.
    wrt, wit, irm, iim = _build_dft_mats(N, T)

    # tokenEmb input: (B,T,N) -> (B,N,T) -> (B, N*T); the *embeddings broadcast
    # to D=128 happens inside the kernel (keeps HBM input D-times smaller).
    x2 = jnp.transpose(x, (0, 2, 1)).reshape(B, M).astype(jnp.float32)

    fparams = jnp.stack([jnp.diagonal(params["r2"]),     # einsum('blcd,dd->blcd')
                         jnp.diagonal(params["i2"]),     # == diagonal scale
                         params["rb2"], params["ib2"]], axis=0)      # (4, D)

    xt = freq_mlp_pallas(x2, params["embeddings"],
                         jnp.asarray(wrt), jnp.asarray(wit),
                         jnp.asarray(irm), jnp.asarray(iim),
                         fparams)                                    # (B, N*T, D)

    # (B, N*T, D) -> (B*N, T*D): identical row-major layout (free reshape).
    xflat = xt.reshape(B * N, T * D)
    out = fc_pallas(xflat, params["w1"], params["b1"],
                    params["w2"], params["b2"])                      # (B*N, P)
    return jnp.transpose(out.reshape(B, N, pred_len), (0, 2, 1))     # (B, P, N)


# Pure-JAX reference (numerical verification only)
def model2_ref(x, params, pred_len):
    B, T, N = x.shape
    xe = jnp.transpose(x, (0, 2, 1))[..., None] * params["embeddings"][0]
    xf = jnp.fft.rfft2(xe, axes=(-3, -2), norm="ortho")
    rd = jnp.diagonal(params["r2"])
    idg = jnp.diagonal(params["i2"])
    o_r = jax.nn.relu(xf.real * rd - xf.imag * idg + params["rb2"])
    o_i = jax.nn.relu(xf.imag * rd + xf.real * idg + params["ib2"])
    shrink = lambda v: jnp.where(v > LAMBDA, v - LAMBDA,
                                 jnp.where(v < -LAMBDA, v + LAMBDA, 0.0))
    yf = shrink(o_r) + 1j * shrink(o_i)
    xt = jnp.fft.irfft2(yf, s=(N, T), axes=(-3, -2), norm="ortho")
    h = xt.reshape(B, N, T * EMBED) @ params["w1"] + params["b1"]
    h = jnp.where(h >= 0.0, h, LEAKY_SLOPE * h)
    out = h @ params["w2"] + params["b2"]
    return jnp.transpose(out, (0, 2, 1))


def init_params(key, seq_len, pred_len):
    ks = jax.random.split(key, 9)
    kdim = seq_len * EMBED
    return {
        "embeddings": jax.random.normal(ks[0], (1, EMBED), jnp.float32),
        "r2":  SCALE * jax.random.normal(ks[1], (EMBED, EMBED), jnp.float32),
        "i2":  SCALE * jax.random.normal(ks[2], (EMBED, EMBED), jnp.float32),
        "rb2": SCALE * jax.random.normal(ks[3], (EMBED,), jnp.float32),
        "ib2": SCALE * jax.random.normal(ks[4], (EMBED,), jnp.float32),
        # fc: Linear(seq_len*EMBED -> HIDDEN), LeakyReLU, Linear(HIDDEN -> pred_len)
        "w1":  SCALE * jax.random.normal(ks[5], (kdim, HIDDEN), jnp.float32),
        "b1":  SCALE * jax.random.normal(ks[6], (HIDDEN,), jnp.float32),
        "w2":  SCALE * jax.random.normal(ks[7], (HIDDEN, pred_len), jnp.float32),
        "b2":  SCALE * jax.random.normal(ks[8], (pred_len,), jnp.float32),
        # r1/i1/rb1/ib1 exist in __init__ but are unused in forward().
    }


if __name__ == "__main__":
    B, T, N = 2, 8, 4          # batch, seq_len, enc_in
    PRED_LEN = 4

    key = jax.random.PRNGKey(0)
    kp, kx = jax.random.split(key)
    params = init_params(kp, T, PRED_LEN)
    x = jax.random.normal(kx, (B, T, N), dtype=jnp.float32)

    fwd = jax.jit(lambda xx: model2_forward(xx, params, PRED_LEN))
    out = fwd(x)
    jax.block_until_ready(out)

    assert out.shape == (B, PRED_LEN, N), out.shape

    ref = model2_ref(x, params, PRED_LEN)
    assert jnp.allclose(out, ref, rtol=1e-3, atol=2e-4), \
        float(jnp.max(jnp.abs(out - ref)))

    print("KERNEL_OK")
</pallas_src>

<mosaic_0001>
module attributes {stable_mosaic.version = 11 : i64} {
  func.func @kernel(%arg0: i32, %arg1: memref<2x32xf32, #tpu.memory_space<vmem>>, %arg2: memref<1x128xf32, #tpu.memory_space<vmem>>, %arg3: memref<20x32xf32, #tpu.memory_space<vmem>>, %arg4: memref<20x32xf32, #tpu.memory_space<vmem>>, %arg5: memref<32x20xf32, #tpu.memory_space<vmem>>, %arg6: memref<32x20xf32, #tpu.memory_space<vmem>>, %arg7: memref<4x128xf32, #tpu.memory_space<vmem>>, %arg8: memref<2x32x128xf32, #tpu.memory_space<vmem>>) attributes {dimension_semantics = [#tpu.dimension_semantics<parallel>], iteration_bounds = array<i64: 1>, scalar_prefetch = 0 : i64, scratch_operands = 0 : i64, tpu.core_type = #tpu.core_type<tc>, window_params = [{transform_indices = @transform_0, window_bounds = array<i64: 2, 32>}, {pipeline_mode = #tpu.pipeline_mode<synchronous>, transform_indices = @transform_1, window_bounds = array<i64: 1, 128>}, {pipeline_mode = #tpu.pipeline_mode<synchronous>, transform_indices = @transform_2, window_bounds = array<i64: 20, 32>}, {pipeline_mode = #tpu.pipeline_mode<synchronous>, transform_indices = @transform_3, window_bounds = array<i64: 20, 32>}, {pipeline_mode = #tpu.pipeline_mode<synchronous>, transform_indices = @transform_4, window_bounds = array<i64: 32, 20>}, {pipeline_mode = #tpu.pipeline_mode<synchronous>, transform_indices = @transform_5, window_bounds = array<i64: 32, 20>}, {pipeline_mode = #tpu.pipeline_mode<synchronous>, transform_indices = @transform_6, window_bounds = array<i64: 4, 128>}, {transform_indices = @transform_7, window_bounds = array<i64: 2, 32, 128>}]} {
    %c0 = arith.constant 0 : index
    %c0_0 = arith.constant 0 : index
    %0 = vector.load %arg2[%c0, %c0_0] : memref<1x128xf32, #tpu.memory_space<vmem>>, vector<1x128xf32>
    %c0_1 = arith.constant 0 : index
    %c0_2 = arith.constant 0 : index
    %1 = vector.load %arg3[%c0_1, %c0_2] : memref<20x32xf32, #tpu.memory_space<vmem>>, vector<20x32xf32>
    %c0_3 = arith.constant 0 : index
    %c0_4 = arith.constant 0 : index
    %2 = vector.load %arg4[%c0_3, %c0_4] : memref<20x32xf32, #tpu.memory_space<vmem>>, vector<20x32xf32>
    %c0_5 = arith.constant 0 : index
    %c0_6 = arith.constant 0 : index
    %3 = vector.load %arg5[%c0_5, %c0_6] : memref<32x20xf32, #tpu.memory_space<vmem>>, vector<32x20xf32>
    %c0_7 = arith.constant 0 : index
    %c0_8 = arith.constant 0 : index
    %4 = vector.load %arg6[%c0_7, %c0_8] : memref<32x20xf32, #tpu.memory_space<vmem>>, vector<32x20xf32>
    %c0_9 = arith.constant 0 : index
    %c0_10 = arith.constant 0 : index
    %5 = vector.load %arg7[%c0_9, %c0_10] : memref<4x128xf32, #tpu.memory_space<vmem>>, vector<1x128xf32>
    %c1 = arith.constant 1 : index
    %c0_11 = arith.constant 0 : index
    %6 = vector.load %arg7[%c1, %c0_11] : memref<4x128xf32, #tpu.memory_space<vmem>>, vector<1x128xf32>
    %c2 = arith.constant 2 : index
    %c0_12 = arith.constant 0 : index
    %7 = vector.load %arg7[%c2, %c0_12] : memref<4x128xf32, #tpu.memory_space<vmem>>, vector<1x128xf32>
    %c3 = arith.constant 3 : index
    %c0_13 = arith.constant 0 : index
    %8 = vector.load %arg7[%c3, %c0_13] : memref<4x128xf32, #tpu.memory_space<vmem>>, vector<1x128xf32>
    %c0_14 = arith.constant 0 : index
    %c0_15 = arith.constant 0 : index
    %9 = vector.load %arg1[%c0_14, %c0_15] : memref<2x32xf32, #tpu.memory_space<vmem>>, vector<2x32xf32>
    %10 = vector.extract_strided_slice %9 {offsets = [0, 0], sizes = [1, 32], strides = [1, 1]} : vector<2x32xf32> to vector<1x32xf32>
    %11 = vector.shape_cast %10 : vector<1x32xf32> to vector<32xf32>
    %12 = vector.shape_cast %11 : vector<32xf32> to vector<32x1xf32>
    %13 = vector.broadcast %12 : vector<32x1xf32> to vector<32x128xf32>
    %14 = vector.broadcast %0 : vector<1x128xf32> to vector<32x128xf32>
    %15 = arith.mulf %13, %14 : vector<32x128xf32>
    %cst = arith.constant dense<0.000000e+00> : vector<20x128xf32>
    %16 = tpu.matmul %1, %15, %cst {dimension_numbers = #tpu.dot_dimension_numbers<[1], [0], [0], [1], [0, 0, 1, 1], [], []>} : vector<20x32xf32>, vector<32x128xf32>, vector<20x128xf32> -> vector<20x128xf32>
    %cst_16 = arith.constant dense<0.000000e+00> : vector<20x128xf32>
    %17 = tpu.matmul %2, %15, %cst_16 {dimension_numbers = #tpu.dot_dimension_numbers<[1], [0], [0], [1], [0, 0, 1, 1], [], []>} : vector<20x32xf32>, vector<32x128xf32>, vector<20x128xf32> -> vector<20x128xf32>
    %18 = vector.broadcast %5 : vector<1x128xf32> to vector<20x128xf32>
    %19 = arith.mulf %16, %18 : vector<20x128xf32>
    %20 = vector.broadcast %6 : vector<1x128xf32> to vector<20x128xf32>
    %21 = arith.mulf %17, %20 : vector<20x128xf32>
    %22 = arith.subf %19, %21 : vector<20x128xf32>
    %23 = vector.broadcast %7 : vector<1x128xf32> to vector<20x128xf32>
    %24 = arith.addf %22, %23 : vector<20x128xf32>
    %cst_17 = arith.constant 0.00999999977 : f32
    %25 = vector.broadcast %cst_17 : f32 to vector<20x128xf32>
    %26 = arith.subf %24, %25 : vector<20x128xf32>
    %cst_18 = arith.constant 0.000000e+00 : f32
    %27 = vector.broadcast %cst_18 : f32 to vector<20x128xf32>
    %28 = arith.maximumf %26, %27 : vector<20x128xf32>
    %29 = vector.broadcast %5 : vector<1x128xf32> to vector<20x128xf32>
    %30 = arith.mulf %17, %29 : vector<20x128xf32>
    %31 = vector.broadcast %6 : vector<1x128xf32> to vector<20x128xf32>
    %32 = arith.mulf %16, %31 : vector<20x128xf32>
    %33 = arith.addf %30, %32 : vector<20x128xf32>
    %34 = vector.broadcast %8 : vector<1x128xf32> to vector<20x128xf32>
    %35 = arith.addf %33, %34 : vector<20x128xf32>
    %cst_19 = arith.constant 0.00999999977 : f32
    %36 = vector.broadcast %cst_19 : f32 to vector<20x128xf32>
    %37 = arith.subf %35, %36 : vector<20x128xf32>
    %cst_20 = arith.constant 0.000000e+00 : f32
    %38 = vector.broadcast %cst_20 : f32 to vector<20x128xf32>
    %39 = arith.maximumf %37, %38 : vector<20x128xf32>
    %cst_21 = arith.constant dense<0.000000e+00> : vector<32x128xf32>
    %40 = tpu.matmul %3, %28, %cst_21 {dimension_numbers = #tpu.dot_dimension_numbers<[1], [0], [0], [1], [0, 0, 1, 1], [], []>} : vector<32x20xf32>, vector<20x128xf32>, vector<32x128xf32> -> vector<32x128xf32>
    %cst_22 = arith.constant dense<0.000000e+00> : vector<32x128xf32>
    %41 = tpu.matmul %4, %39, %cst_22 {dimension_numbers = #tpu.dot_dimension_numbers<[1], [0], [0], [1], [0, 0, 1, 1], [], []>} : vector<32x20xf32>, vector<20x128xf32>, vector<32x128xf32> -> vector<32x128xf32>
    %42 = arith.addf %40, %41 : vector<32x128xf32>
    %c0_23 = arith.constant 0 : index
    %c0_24 = arith.constant 0 : index
    %c0_25 = arith.constant 0 : index
    %43 = vector.load %arg8[%c0_23, %c0_24, %c0_25] : memref<2x32x128xf32, #tpu.memory_space<vmem>>, vector<1x32x128xf32>
    %44 = vector.shape_cast %43 : vector<1x32x128xf32> to vector<32x128xf32>
    %45 = vector.shape_cast %42 : vector<32x128xf32> to vector<1x32x128xf32>
    tpu.vector_store %arg8[%c0_23, %c0_24, %c0_25], %45 {strides = array<i32>} : memref<2x32x128xf32, #tpu.memory_space<vmem>>, vector<1x32x128xf32>,
    %46 = vector.extract_strided_slice %9 {offsets = [1, 0], sizes = [1, 32], strides = [1, 1]} : vector<2x32xf32> to vector<1x32xf32>
    %47 = vector.shape_cast %46 : vector<1x32xf32> to vector<32xf32>
    %48 = vector.shape_cast %47 : vector<32xf32> to vector<32x1xf32>
    %49 = vector.broadcast %48 : vector<32x1xf32> to vector<32x128xf32>
    %50 = vector.broadcast %0 : vector<1x128xf32> to vector<32x128xf32>
    %51 = arith.mulf %49, %50 : vector<32x128xf32>
    %cst_26 = arith.constant dense<0.000000e+00> : vector<20x128xf32>
    %52 = tpu.matmul %1, %51, %cst_26 {dimension_numbers = #tpu.dot_dimension_numbers<[1], [0], [0], [1], [0, 0, 1, 1], [], []>} : vector<20x32xf32>, vector<32x128xf32>, vector<20x128xf32> -> vector<20x128xf32>
    %cst_27 = arith.constant dense<0.000000e+00> : vector<20x128xf32>
    %53 = tpu.matmul %2, %51, %cst_27 {dimension_numbers = #tpu.dot_dimension_numbers<[1], [0], [0], [1], [0, 0, 1, 1], [], []>} : vector<20x32xf32>, vector<32x128xf32>, vector<20x128xf32> -> vector<20x128xf32>
    %54 = vector.broadcast %5 : vector<1x128xf32> to vector<20x128xf32>
    %55 = arith.mulf %52, %54 : vector<20x128xf32>
    %56 = vector.broadcast %6 : vector<1x128xf32> to vector<20x128xf32>
    %57 = arith.mulf %53, %56 : vector<20x128xf32>
    %58 = arith.subf %55, %57 : vector<20x128xf32>
    %59 = vector.broadcast %7 : vector<1x128xf32> to vector<20x128xf32>
    %60 = arith.addf %58, %59 : vector<20x128xf32>
    %cst_28 = arith.constant 0.00999999977 : f32
    %61 = vector.broadcast %cst_28 : f32 to vector<20x128xf32>
    %62 = arith.subf %60, %61 : vector<20x128xf32>
    %cst_29 = arith.constant 0.000000e+00 : f32
    %63 = vector.broadcast %cst_29 : f32 to vector<20x128xf32>
    %64 = arith.maximumf %62, %63 : vector<20x128xf32>
    %65 = vector.broadcast %5 : vector<1x128xf32> to vector<20x128xf32>
    %66 = arith.mulf %53, %65 : vector<20x128xf32>
    %67 = vector.broadcast %6 : vector<1x128xf32> to vector<20x128xf32>
    %68 = arith.mulf %52, %67 : vector<20x128xf32>
    %69 = arith.addf %66, %68 : vector<20x128xf32>
    %70 = vector.broadcast %8 : vector<1x128xf32> to vector<20x128xf32>
    %71 = arith.addf %69, %70 : vector<20x128xf32>
    %cst_30 = arith.constant 0.00999999977 : f32
    %72 = vector.broadcast %cst_30 : f32 to vector<20x128xf32>
    %73 = arith.subf %71, %72 : vector<20x128xf32>
    %cst_31 = arith.constant 0.000000e+00 : f32
    %74 = vector.broadcast %cst_31 : f32 to vector<20x128xf32>
    %75 = arith.maximumf %73, %74 : vector<20x128xf32>
    %cst_32 = arith.constant dense<0.000000e+00> : vector<32x128xf32>
    %76 = tpu.matmul %3, %64, %cst_32 {dimension_numbers = #tpu.dot_dimension_numbers<[1], [0], [0], [1], [0, 0, 1, 1], [], []>} : vector<32x20xf32>, vector<20x128xf32>, vector<32x128xf32> -> vector<32x128xf32>
    %cst_33 = arith.constant dense<0.000000e+00> : vector<32x128xf32>
    %77 = tpu.matmul %4, %75, %cst_33 {dimension_numbers = #tpu.dot_dimension_numbers<[1], [0], [0], [1], [0, 0, 1, 1], [], []>} : vector<32x20xf32>, vector<20x128xf32>, vector<32x128xf32> -> vector<32x128xf32>
    %78 = arith.addf %76, %77 : vector<32x128xf32>
    %c1_34 = arith.constant 1 : index
    %c0_35 = arith.constant 0 : index
    %c0_36 = arith.constant 0 : index
    %79 = vector.load %arg8[%c1_34, %c0_35, %c0_36] : memref<2x32x128xf32, #tpu.memory_space<vmem>>, vector<1x32x128xf32>
    %80 = vector.shape_cast %79 : vector<1x32x128xf32> to vector<32x128xf32>
    %81 = vector.shape_cast %78 : vector<32x128xf32> to vector<1x32x128xf32>
    tpu.vector_store %arg8[%c1_34, %c0_35, %c0_36], %81 {strides = array<i32>} : memref<2x32x128xf32, #tpu.memory_space<vmem>>, vector<1x32x128xf32>,
    return
  }
  func.func @transform_0(%arg0: i32) -> (i32, i32) {
    %c0_i32 = arith.constant 0 : i32
    %c0_i32_0 = arith.constant 0 : i32
    return %arg0, %c0_i32 : i32, i32
  }
  func.func @transform_1(%arg0: i32) -> (i32, i32) {
    %c0_i32 = arith.constant 0 : i32
    %c0_i32_0 = arith.constant 0 : i32
    %c0_i32_1 = arith.constant 0 : i32
    return %c0_i32, %c0_i32_0 : i32, i32
  }
  func.func @transform_2(%arg0: i32) -> (i32, i32) {
    %c0_i32 = arith.constant 0 : i32
    %c0_i32_0 = arith.constant 0 : i32
    %c0_i32_1 = arith.constant 0 : i32
    return %c0_i32, %c0_i32_0 : i32, i32
  }
  func.func @transform_3(%arg0: i32) -> (i32, i32) {
    %c0_i32 = arith.constant 0 : i32
    %c0_i32_0 = arith.constant 0 : i32
    %c0_i32_1 = arith.constant 0 : i32
    return %c0_i32, %c0_i32_0 : i32, i32
  }
  func.func @transform_4(%arg0: i32) -> (i32, i32) {
    %c0_i32 = arith.constant 0 : i32
    %c0_i32_0 = arith.constant 0 : i32
    %c0_i32_1 = arith.constant 0 : i32
    return %c0_i32, %c0_i32_0 : i32, i32
  }
  func.func @transform_5(%arg0: i32) -> (i32, i32) {
    %c0_i32 = arith.constant 0 : i32
    %c0_i32_0 = arith.constant 0 : i32
    %c0_i32_1 = arith.constant 0 : i32
    return %c0_i32, %c0_i32_0 : i32, i32
  }
  func.func @transform_6(%arg0: i32) -> (i32, i32) {
    %c0_i32 = arith.constant 0 : i32
    %c0_i32_0 = arith.constant 0 : i32
    %c0_i32_1 = arith.constant 0 : i32
    return %c0_i32, %c0_i32_0 : i32, i32
  }
  func.func @transform_7(%arg0: i32) -> (i32, i32, i32) {
    %c0_i32 = arith.constant 0 : i32
    %c0_i32_0 = arith.constant 0 : i32
    %c0_i32_1 = arith.constant 0 : i32
    return %arg0, %c0_i32, %c0_i32_0 : i32, i32, i32
  }
}

module attributes {stable_mosaic.version = 11 : i64} {
  func.func @kernel(%arg0: i32, %arg1: memref<8x1024xf32, #tpu.memory_space<vmem>>, %arg2: memref<1024x256xf32, #tpu.memory_space<vmem>>, %arg3: memref<1x256xf32, #tpu.memory_space<vmem>>, %arg4: memref<256x128xf32, #tpu.memory_space<vmem>>, %arg5: memref<1x128xf32, #tpu.memory_space<vmem>>, %arg6: memref<8x128xf32, #tpu.memory_space<vmem>>) attributes {dimension_semantics = [#tpu.dimension_semantics<parallel>], iteration_bounds = array<i64: 1>, scalar_prefetch = 0 : i64, scratch_operands = 0 : i64, tpu.core_type = #tpu.core_type<tc>, window_params = [{transform_indices = @transform_0, window_bounds = array<i64: 8, 1024>}, {pipeline_mode = #tpu.pipeline_mode<synchronous>, transform_indices = @transform_1, window_bounds = array<i64: 1024, 256>}, {pipeline_mode = #tpu.pipeline_mode<synchronous>, transform_indices = @transform_2, window_bounds = array<i64: 1, 256>}, {pipeline_mode = #tpu.pipeline_mode<synchronous>, transform_indices = @transform_3, window_bounds = array<i64: 256, 128>}, {pipeline_mode = #tpu.pipeline_mode<synchronous>, transform_indices = @transform_4, window_bounds = array<i64: 1, 128>}, {transform_indices = @transform_5, window_bounds = array<i64: 8, 128>}]} {
    %c0 = arith.constant 0 : index
    %c0_0 = arith.constant 0 : index
    %0 = vector.load %arg1[%c0, %c0_0] : memref<8x1024xf32, #tpu.memory_space<vmem>>, vector<8x1024xf32>
    %c0_1 = arith.constant 0 : index
    %c0_2 = arith.constant 0 : index
    %1 = vector.load %arg2[%c0_1, %c0_2] : memref<1024x256xf32, #tpu.memory_space<vmem>>, vector<1024x256xf32>
    %cst = arith.constant dense<0.000000e+00> : vector<8x256xf32>
    %2 = tpu.matmul %0, %1, %cst {dimension_numbers = #tpu.dot_dimension_numbers<[1], [0], [0], [1], [0, 0, 1, 1], [], []>} : vector<8x1024xf32>, vector<1024x256xf32>, vector<8x256xf32> -> vector<8x256xf32>
    %c0_3 = arith.constant 0 : index
    %c0_4 = arith.constant 0 : index
    %3 = vector.load %arg3[%c0_3, %c0_4] : memref<1x256xf32, #tpu.memory_space<vmem>>, vector<1x256xf32>
    %4 = vector.broadcast %3 : vector<1x256xf32> to vector<8x256xf32>
    %5 = arith.addf %2, %4 : vector<8x256xf32>
    %cst_5 = arith.constant 0.000000e+00 : f32
    %6 = vector.broadcast %cst_5 : f32 to vector<8x256xf32>
    %7 = arith.cmpf oge, %5, %6 : vector<8x256xf32>
    %cst_6 = arith.constant 0.00999999977 : f32
    %8 = vector.broadcast %cst_6 : f32 to vector<8x256xf32>
    %9 = arith.mulf %8, %5 : vector<8x256xf32>
    %10 = arith.select %7, %5, %9 : vector<8x256xi1>, vector<8x256xf32>
    %c0_7 = arith.constant 0 : index
    %c0_8 = arith.constant 0 : index
    %11 = vector.load %arg4[%c0_7, %c0_8] : memref<256x128xf32, #tpu.memory_space<vmem>>, vector<256x128xf32>
    %cst_9 = arith.constant dense<0.000000e+00> : vector<8x128xf32>
    %12 = tpu.matmul %10, %11, %cst_9 {dimension_numbers = #tpu.dot_dimension_numbers<[1], [0], [0], [1], [0, 0, 1, 1], [], []>} : vector<8x256xf32>, vector<256x128xf32>, vector<8x128xf32> -> vector<8x128xf32>
    %c0_10 = arith.constant 0 : index
    %c0_11 = arith.constant 0 : index
    %13 = vector.load %arg5[%c0_10, %c0_11] : memref<1x128xf32, #tpu.memory_space<vmem>>, vector<1x128xf32>
    %14 = vector.broadcast %13 : vector<1x128xf32> to vector<8x128xf32>
    %15 = arith.addf %12, %14 : vector<8x128xf32>
    %c0_12 = arith.constant 0 : index
    %c0_13 = arith.constant 0 : index
    %16 = vector.load %arg6[%c0_12, %c0_13] : memref<8x128xf32, #tpu.memory_space<vmem>>, vector<8x128xf32>
    tpu.vector_store %arg6[%c0_12, %c0_13], %15 {strides = array<i32>} : memref<8x128xf32, #tpu.memory_space<vmem>>, vector<8x128xf32>,
    return
  }
  func.func @transform_0(%arg0: i32) -> (i32, i32) {
    %c0_i32 = arith.constant 0 : i32
    %c0_i32_0 = arith.constant 0 : i32
    return %arg0, %c0_i32 : i32, i32
  }
  func.func @transform_1(%arg0: i32) -> (i32, i32) {
    %c0_i32 = arith.constant 0 : i32
    %c0_i32_0 = arith.constant 0 : i32
    %c0_i32_1 = arith.constant 0 : i32
    return %c0_i32, %c0_i32_0 : i32, i32
  }
  func.func @transform_2(%arg0: i32) -> (i32, i32) {
    %c0_i32 = arith.constant 0 : i32
    %c0_i32_0 = arith.constant 0 : i32
    %c0_i32_1 = arith.constant 0 : i32
    return %c0_i32, %c0_i32_0 : i32, i32
  }
  func.func @transform_3(%arg0: i32) -> (i32, i32) {
    %c0_i32 = arith.constant 0 : i32
    %c0_i32_0 = arith.constant 0 : i32
    %c0_i32_1 = arith.constant 0 : i32
    return %c0_i32, %c0_i32_0 : i32, i32
  }
  func.func @transform_4(%arg0: i32) -> (i32, i32) {
    %c0_i32 = arith.constant 0 : i32
    %c0_i32_0 = arith.constant 0 : i32
    %c0_i32_1 = arith.constant 0 : i32
    return %c0_i32, %c0_i32_0 : i32, i32
  }
  func.func @transform_5(%arg0: i32) -> (i32, i32) {
    %c0_i32 = arith.constant 0 : i32
    %c0_i32_0 = arith.constant 0 : i32
    return %arg0, %c0_i32 : i32, i32
  }
}

</mosaic_0001>

<llo_original>
// kernel: _lambda_.2
$region0: #{_lambda_.2}
  #allocation0 [shape = 'u32[]', space=smem, size = 0x4, offset = 0x4, fixed_abs, tag = 'smem constant byte address 0x4 - core index']
  #allocation1 [shape = 'u32[144,128]{1,0:T(1,128)}', space=vmem, size = 0x12000, scoped, tag = 'internal scratch']
  %s0 = inlined_call_operand.vmem [shape: f32[2,32], index: 0, kind: input, shape index: {}]
  %s1 = inlined_call_operand.vmem [shape: f32[1,128], index: 1, kind: input, shape index: {}]
  %s2 = inlined_call_operand.vmem [shape: f32[20,32], index: 2, kind: input, shape index: {}]
  %s3 = inlined_call_operand.vmem [shape: f32[20,32], index: 3, kind: input, shape index: {}]
  %s4 = inlined_call_operand.vmem [shape: f32[32,20], index: 4, kind: input, shape index: {}]
  %s5 = inlined_call_operand.vmem [shape: f32[32,20], index: 5, kind: input, shape index: {}]
  %s6 = inlined_call_operand.vmem [shape: f32[4,128], index: 6, kind: input, shape index: {}]
  %s7 = inlined_call_operand.vmem [shape: f32[2,32,128], index: 7, kind: output, shape index: {}]
  %s8 = sld [smem:[#allocation0]]
  $region38: #{_lambda_.2} parent=0
    _
  %s10 = ssub.s32 1, %s8
  %s11 = scalar_select 0, %s10, %s8
  // Predicated region
  $region2: #{_lambda_.2} parent=0 // pred_check
    _
  $region3: #{_lambda_.2} parent=0 // pred_check_branch
    %13 = sbr.rel (0) target = $region5
  $region4: #{_lambda_.2} parent=0 // pred_region
    _
  $region5: #{_lambda_.2} parent=0 // pred_fallthru
    _
  // Predicated region
  $region6: #{_lambda_.2} parent=0 // pred_check
    _
  $region7: #{_lambda_.2} parent=0 // pred_check_branch
    %15 = sbr.rel (0) target = $region9
  $region8: #{_lambda_.2} parent=0 // pred_region
    _
  $region9: #{_lambda_.2} parent=0 // pred_fallthru
    _
  // Predicated region
  $region10: #{_lambda_.2} parent=0 // pred_check
    _
  $region11: #{_lambda_.2} parent=0 // pred_check_branch
    %17 = sbr.rel (0) target = $region13
  $region12: #{_lambda_.2} parent=0 // pred_region
    _
  $region13: #{_lambda_.2} parent=0 // pred_fallthru
    _
  // Predicated region
  $region14: #{_lambda_.2} parent=0 // pred_check
    _
  $region15: #{_lambda_.2} parent=0 // pred_check_branch
    %19 = sbr.rel (0) target = $region17
  $region16: #{_lambda_.2} parent=0 // pred_region
    _
  $region17: #{_lambda_.2} parent=0 // pred_fallthru
    _
  // Predicated region
  $region18: #{_lambda_.2} parent=0 // pred_check
    _
  $region19: #{_lambda_.2} parent=0 // pred_check_branch
    %21 = sbr.rel (0) target = $region21
  $region20: #{_lambda_.2} parent=0 // pred_region
    _
  $region21: #{_lambda_.2} parent=0 // pred_fallthru
    _
  // Predicated region
  $region22: #{_lambda_.2} parent=0 // pred_check
    _
  $region23: #{_lambda_.2} parent=0 // pred_check_branch
    %23 = sbr.rel (0) target = $region25
  $region24: #{_lambda_.2} parent=0 // pred_region
    _
  $region25: #{_lambda_.2} parent=0 // pred_fallthru
    _
  // Predicated region
  $region26: #{_lambda_.2} parent=0 // pred_check
    _
  $region27: #{_lambda_.2} parent=0 // pred_check_branch
    %25 = sbr.rel (0) target = $region29
  $region28: #{_lambda_.2} parent=0 // pred_region
    _
  $region29: #{_lambda_.2} parent=0 // pred_fallthru
    _
  %v26 = vld [vmem:[%s1] sm:$0x1]
  %v27 = vld [vmem:[%s2] sm:$0xff]
  %v28 = vld [vmem:[%s2 + $0x8] sm:$0xff]
  %v29 = vld [vmem:[%s2 + $0x10] sm:$0xf]
  %v30 = vld [vmem:[%s3] sm:$0xff]
  %v31 = vld [vmem:[%s3 + $0x8] sm:$0xff]
  %v32 = vld [vmem:[%s3 + $0x10] sm:$0xf]
  %v33 = vld [vmem:[%s4] sm:$0xff]
  %v34 = vld [vmem:[%s4 + $0x8] sm:$0xff]
  %v35 = vld [vmem:[%s4 + $0x10] sm:$0xff]
  %v36 = vld [vmem:[%s4 + $0x18] sm:$0xff]
  %v37 = vld [vmem:[%s5] sm:$0xff]
  %v38 = vld [vmem:[%s5 + $0x8] sm:$0xff]
  %v39 = vld [vmem:[%s5 + $0x10] sm:$0xff]
  %v40 = vld [vmem:[%s5 + $0x18] sm:$0xff]
  %v41 = vld [vmem:[%s6] sm:$0x1]
  %v42 = vld [vmem:[%s6 + $0x1] sm:$0x1]
  %v43 = vld [vmem:[%s6 + $0x2] sm:$0x1]
  %v44 = vld [vmem:[%s6 + $0x3] sm:$0x1]
  %v45 = vld [vmem:[%s0] sm:$0x3]
  %v46 = vlaneseq
  %v47 = vshrl.u32 %v46, 7
  %v48 = vsub.s32 0, %v47
  %v49 = vrot.slane %v45, %v48
  %51 = vbcast.lane.b32.xlu0 %v49, 256
  %v52 = vpop.permute.xlu0 %51
  %s54 = sor.u32 256, 8
  %55 = vbcast.lane.b32.xlu0 %v49, %s54
  %v56 = vpop.permute.xlu0 %55
  %s58 = sor.u32 256, 16
  %59 = vbcast.lane.b32.xlu0 %v49, %s58
  %v60 = vpop.permute.xlu0 %59
  %s62 = sor.u32 256, 24
  %63 = vbcast.lane.b32.xlu0 %v49, %s62
  %v64 = vpop.permute.xlu0 %63
  %v66 = vlaneseq
  %v67 = vshrl.u32 %v66, 7
  %v68 = vsub.s32 0, %v67
  %v69 = vrot.slane %v26, %v68
  %v71 = vmul.f32 %v52, %v69
  %v72 = vmul.f32 %v56, %v69
  %v73 = vmul.f32 %v60, %v69
  %v74 = vmul.f32 %v64, %v69
  %vm75 = vcmask 261120
  %v77 = vsel %vm75, %v27, 0
  %v80 = vsel %vm75, %v28, 0
  %v83 = vsel %vm75, %v29, 0
  %85 = vmatprep.subr.mxu0 0.0
  %86 = vmatpush1.msra.mxu0 0.0
  %87 = vmatprep.subr.mxu0 0.0
  %88 = vmatpush1.msra.mxu0 0.0
  %89 = vmatprep.subr.mxu0 0.0
  %90 = vmatpush1.msra.mxu0 0.0
  %91 = vmatprep.subr.mxu0 0.0
  %92 = vmatpush1.msra.mxu0 0.0
  %93 = vmatprep.subr.mxu0 0.0
  %94 = vmatpush1.msra.mxu0 0.0
  %95 = vmatprep.subr.mxu0 0.0
  %96 = vmatpush1.msra.mxu0 0.0
  %97 = vmatprep.subr.mxu0 0.0
  %98 = vmatpush1.msra.mxu0 0.0
  %99 = vmatprep.subr.mxu0 0.0
  %100 = vmatpush1.msra.mxu0 0.0
  %101 = vmatprep.subr.mxu0 0.0
  %102 = vmatpush1.msra.mxu0 0.0
  %103 = vmatprep.subr.mxu0 0.0
  %104 = vmatpush1.msra.mxu0 0.0
  %105 = vmatprep.subr.mxu0 0.0
  %106 = vmatpush1.msra.mxu0 0.0
  %107 = vmatprep.subr.mxu0 0.0
  %108 = vmatpush1.msra.mxu0 0.0
  %109 = vmatprep.subr.mxu0 0.0
  %110 = vmatpush1.msra.mxu0 %v74
  %111 = vmatprep.subr.mxu0 0.0
  %112 = vmatpush1.msra.mxu0 %v73
  %113 = vmatprep.subr.mxu0 0.0
  %114 = vmatpush1.msra.mxu0 %v72
  %115 = vmatprep.subr.mxu0 0.0
  %116 = vmatpush1.msra.mxu0 %v71
  %117 = vmatprep.subr.mxu0 0.0
  %118 = vmatpush2.msra.mxu0 0.0
  %119 = vmatprep.subr.mxu0 0.0
  %120 = vmatpush2.msra.mxu0 0.0
  %121 = vmatprep.subr.mxu0 0.0
  %122 = vmatpush2.msra.mxu0 0.0
  %123 = vmatprep.subr.mxu0 0.0
  %124 = vmatpush2.msra.mxu0 0.0
  %125 = vmatprep.subr.mxu0 0.0
  %126 = vmatpush2.msra.mxu0 0.0
  %127 = vmatprep.subr.mxu0 0.0
  %128 = vmatpush2.msra.mxu0 0.0
  %129 = vmatprep.subr.mxu0 0.0
  %130 = vmatpush2.msra.mxu0 0.0
  %131 = vmatprep.subr.mxu0 0.0
  %132 = vmatpush2.msra.mxu0 0.0
  %133 = vmatprep.subr.mxu0 0.0
  %134 = vmatpush2.msra.mxu0 0.0
  %135 = vmatprep.subr.mxu0 0.0
  %136 = vmatpush2.msra.mxu0 0.0
  %137 = vmatprep.subr.mxu0 0.0
  %138 = vmatpush2.msra.mxu0 0.0
  %139 = vmatprep.subr.mxu0 0.0
  %140 = vmatpush2.msra.mxu0 0.0
  %141 = vmatprep.subr.mxu0 0.0
  %142 = vmatpush2.msra.mxu0 0.0
  %143 = vmatprep.subr.mxu0 0.0
  %144 = vmatpush2.msra.mxu0 0.0
  %145 = vmatprep.subr.mxu0 0.0
  %146 = vmatpush2.msra.mxu0 0.0
  %147 = vmatprep.subr.mxu0 0.0
  %148 = vmatpush2.msra.mxu0 0.0
  %149 = vmatprep.mubr.f32.mxu0 0.0
  %150 = vmatmul.mubr.f32.gmra.mxu0 %v77
  %v151 = vpop.f32.mrf.mxu0
  %v152 = vadd.f32 0.0, %v151
  %v153 = vpop.f32.mrf.mxu0
  %154 = vmatprep.mubr.f32.mxu0 0.0
  %155 = vmatmul.mubr.f32.gmra.mxu0 %v80
  %v156 = vpop.f32.mrf.mxu0
  %v157 = vadd.f32 0.0, %v156
  %v158 = vpop.f32.mrf.mxu0
  %159 = vmatprep.mubr.f32.mxu0 0.0
  %160 = vmatmul.mubr.f32.gmra.mxu0 %v83
  %v161 = vpop.f32.mrf.mxu0
  %v162 = vadd.f32 0.0, %v161
  %v163 = vpop.f32.mrf.mxu0
  %164 = vdwg.mxu0
  %v166 = vsel %vm75, %v30, 0
  %v169 = vsel %vm75, %v31, 0
  %v172 = vsel %vm75, %v32, 0
  %174 = vmatprep.subr.mxu0 0.0
  %175 = vmatpush1.msra.mxu0 0.0
  %176 = vmatprep.subr.mxu0 0.0
  %177 = vmatpush1.msra.mxu0 0.0
  %178 = vmatprep.subr.mxu0 0.0
  %179 = vmatpush1.msra.mxu0 0.0
  %180 = vmatprep.subr.mxu0 0.0
  %181 = vmatpush1.msra.mxu0 0.0
  %182 = vmatprep.subr.mxu0 0.0
  %183 = vmatpush1.msra.mxu0 0.0
  %184 = vmatprep.subr.mxu0 0.0
  %185 = vmatpush1.msra.mxu0 0.0
  %186 = vmatprep.subr.mxu0 0.0
  %187 = vmatpush1.msra.mxu0 0.0
  %188 = vmatprep.subr.mxu0 0.0
  %189 = vmatpush1.msra.mxu0 0.0
  %190 = vmatprep.subr.mxu0 0.0
  %191 = vmatpush1.msra.mxu0 0.0
  %192 = vmatprep.subr.mxu0 0.0
  %193 = vmatpush1.msra.mxu0 0.0
  %194 = vmatprep.subr.mxu0 0.0
  %195 = vmatpush1.msra.mxu0 0.0
  %196 = vmatprep.subr.mxu0 0.0
  %197 = vmatpush1.msra.mxu0 0.0
  %198 = vmatprep.subr.mxu0 0.0
  %199 = vmatpush1.msra.mxu0 %v74
  %200 = vmatprep.subr.mxu0 0.0
  %201 = vmatpush1.msra.mxu0 %v73
  %202 = vmatprep.subr.mxu0 0.0
  %203 = vmatpush1.msra.mxu0 %v72
  %204 = vmatprep.subr.mxu0 0.0
  %205 = vmatpush1.msra.mxu0 %v71
  %206 = vmatprep.subr.mxu0 0.0
  %207 = vmatpush2.msra.mxu0 0.0
  %208 = vmatprep.subr.mxu0 0.0
  %209 = vmatpush2.msra.mxu0 0.0
  %210 = vmatprep.subr.mxu0 0.0
  %211 = vmatpush2.msra.mxu0 0.0
  %212 = vmatprep.subr.mxu0 0.0
  %213 = vmatpush2.msra.mxu0 0.0
  %214 = vmatprep.subr.mxu0 0.0
  %215 = vmatpush2.msra.mxu0 0.0
  %216 = vmatprep.subr.mxu0 0.0
  %217 = vmatpush2.msra.mxu0 0.0
  %218 = vmatprep.subr.mxu0 0.0
  %219 = vmatpush2.msra.mxu0 0.0
  %220 = vmatprep.subr.mxu0 0.0
  %221 = vmatpush2.msra.mxu0 0.0
  %222 = vmatprep.subr.mxu0 0.0
  %223 = vmatpush2.msra.mxu0 0.0
  %224 = vmatprep.subr.mxu0 0.0
  %225 = vmatpush2.msra.mxu0 0.0
  %226 = vmatprep.subr.mxu0 0.0
  %227 = vmatpush2.msra.mxu0 0.0
  %228 = vmatprep.subr.mxu0 0.0
  %229 = vmatpush2.msra.mxu0 0.0
  %230 = vmatprep.subr.mxu0 0.0
  %231 = vmatpush2.msra.mxu0 0.0
  %232 = vmatprep.subr.mxu0 0.0
  %233 = vmatpush2.msra.mxu0 0.0
  %234 = vmatprep.subr.mxu0 0.0
  %235 = vmatpush2.msra.mxu0 0.0
  %236 = vmatprep.subr.mxu0 0.0
  %237 = vmatpush2.msra.mxu0 0.0
  %238 = vmatprep.mubr.f32.mxu0 0.0
  %239 = vmatmul.mubr.f32.gmra.mxu0 %v166
  %v240 = vpop.f32.mrf.mxu0
  %v241 = vadd.f32 0.0, %v240
  %v242 = vpop.f32.mrf.mxu0
  %243 = vmatprep.mubr.f32.mxu0 0.0
  %244 = vmatmul.mubr.f32.gmra.mxu0 %v169
  %v245 = vpop.f32.mrf.mxu0
  %v246 = vadd.f32 0.0, %v245
  %v247 = vpop.f32.mrf.mxu0
  %248 = vmatprep.mubr.f32.mxu0 0.0
  %249 = vmatmul.mubr.f32.gmra.mxu0 %v172
  %v250 = vpop.f32.mrf.mxu0
  %v251 = vadd.f32 0.0, %v250
  %v252 = vpop.f32.mrf.mxu0
  %253 = vdwg.mxu0
  %v254 = vlaneseq
  %v255 = vshrl.u32 %v254, 7
  %v256 = vsub.s32 0, %v255
  %v257 = vrot.slane %v41, %v256
  %v258 = vmul.f32 %v152, %v257
  %v259 = vmul.f32 %v157, %v257
  %v260 = vmul.f32 %v162, %v257
  %v261 = vlaneseq
  %v262 = vshrl.u32 %v261, 7
  %v263 = vsub.s32 0, %v262
  %v264 = vrot.slane %v42, %v263
  %v265 = vmul.f32 %v241, %v264
  %v266 = vmul.f32 %v246, %v264
  %v267 = vmul.f32 %v251, %v264
  %v268 = vsub.f32 %v258, %v265
  %v269 = vsub.f32 %v259, %v266
  %v270 = vsub.f32 %v260, %v267
  %v271 = vlaneseq
  %v272 = vshrl.u32 %v271, 7
  %v273 = vsub.s32 0, %v272
  %v274 = vrot.slane %v43, %v273
  %v275 = vadd.f32 %v268, %v274
  %v276 = vadd.f32 %v269, %v274
  %v277 = vadd.f32 %v270, %v274
  %v278 = vsub.f32 %v275, 0.01
  %v279 = vsub.f32 %v276, 0.01
  %v280 = vsub.f32 %v277, 0.01
  %v281 = vmax.f32 %v278, 0.0
  %v282 = vmax.f32 %v279, 0.0
  %v283 = vmax.f32 %v280, 0.0
  %v284 = vmul.f32 %v241, %v257
  %v285 = vmul.f32 %v246, %v257
  %v286 = vmul.f32 %v251, %v257
  %v287 = vmul.f32 %v152, %v264
  %v288 = vmul.f32 %v157, %v264
  %v289 = vmul.f32 %v162, %v264
  %v290 = vadd.f32 %v284, %v287
  %v291 = vadd.f32 %v285, %v288
  %v292 = vadd.f32 %v286, %v289
  %v293 = vlaneseq
  %v294 = vshrl.u32 %v293, 7
  %v295 = vsub.s32 0, %v294
  %v296 = vrot.slane %v44, %v295
  %v297 = vadd.f32 %v290, %v296
  %v298 = vadd.f32 %v291, %v296
  %v299 = vadd.f32 %v292, %v296
  %v300 = vsub.f32 %v297, 0.01
  %v301 = vsub.f32 %v298, 0.01
  %v302 = vsub.f32 %v299, 0.01
  %v303 = vmax.f32 %v300, 0.0
  %v304 = vmax.f32 %v301, 0.0
  %v305 = vmax.f32 %v302, 0.0
  %vm306 = vcmask 162816
  %v308 = vsel %vm306, %v37, 0
  %v311 = vsel %vm306, %v38, 0
  %v314 = vsel %vm306, %v39, 0
  %v317 = vsel %vm306, %v40, 0
  %vm319 = vcmask 1043456
  %v321 = vsel %vm319, %v305, 0
  %323 = vmatprep.subr.mxu0 0.0
  %324 = vmatpush1.msra.mxu0 0.0
  %325 = vmatprep.subr.mxu0 0.0
  %326 = vmatpush1.msra.mxu0 0.0
  %327 = vmatprep.subr.mxu0 0.0
  %328 = vmatpush1.msra.mxu0 0.0
  %329 = vmatprep.subr.mxu0 0.0
  %330 = vmatpush1.msra.mxu0 0.0
  %331 = vmatprep.subr.mxu0 0.0
  %332 = vmatpush1.msra.mxu0 0.0
  %333 = vmatprep.subr.mxu0 0.0
  %334 = vmatpush1.msra.mxu0 0.0
  %335 = vmatprep.subr.mxu0 0.0
  %336 = vmatpush1.msra.mxu0 0.0
  %337 = vmatprep.subr.mxu0 0.0
  %338 = vmatpush1.msra.mxu0 0.0
  %339 = vmatprep.subr.mxu0 0.0
  %340 = vmatpush1.msra.mxu0 0.0
  %341 = vmatprep.subr.mxu0 0.0
  %342 = vmatpush1.msra.mxu0 0.0
  %343 = vmatprep.subr.mxu0 0.0
  %344 = vmatpush1.msra.mxu0 0.0
  %345 = vmatprep.subr.mxu0 0.0
  %346 = vmatpush1.msra.mxu0 0.0
  %347 = vmatprep.subr.mxu0 0.0
  %348 = vmatpush1.msra.mxu0 0.0
  %349 = vmatprep.subr.mxu0 0.0
  %350 = vmatpush1.msra.mxu0 %v321
  %351 = vmatprep.subr.mxu0 0.0
  %352 = vmatpush1.msra.mxu0 %v304
  %353 = vmatprep.subr.mxu0 0.0
  %354 = vmatpush1.msra.mxu0 %v303
  %355 = vmatprep.subr.mxu0 0.0
  %356 = vmatpush2.msra.mxu0 0.0
  %357 = vmatprep.subr.mxu0 0.0
  %358 = vmatpush2.msra.mxu0 0.0
  %359 = vmatprep.subr.mxu0 0.0
  %360 = vmatpush2.msra.mxu0 0.0
  %361 = vmatprep.subr.mxu0 0.0
  %362 = vmatpush2.msra.mxu0 0.0
  %363 = vmatprep.subr.mxu0 0.0
  %364 = vmatpush2.msra.mxu0 0.0
  %365 = vmatprep.subr.mxu0 0.0
  %366 = vmatpush2.msra.mxu0 0.0
  %367 = vmatprep.subr.mxu0 0.0
  %368 = vmatpush2.msra.mxu0 0.0
  %369 = vmatprep.subr.mxu0 0.0
  %370 = vmatpush2.msra.mxu0 0.0
  %371 = vmatprep.subr.mxu0 0.0
  %372 = vmatpush2.msra.mxu0 0.0
  %373 = vmatprep.subr.mxu0 0.0
  %374 = vmatpush2.msra.mxu0 0.0
  %375 = vmatprep.subr.mxu0 0.0
  %376 = vmatpush2.msra.mxu0 0.0
  %377 = vmatprep.subr.mxu0 0.0
  %378 = vmatpush2.msra.mxu0 0.0
  %379 = vmatprep.subr.mxu0 0.0
  %380 = vmatpush2.msra.mxu0 0.0
  %381 = vmatprep.subr.mxu0 0.0
  %382 = vmatpush2.msra.mxu0 0.0
  %383 = vmatprep.subr.mxu0 0.0
  %384 = vmatpush2.msra.mxu0 0.0
  %385 = vmatprep.subr.mxu0 0.0
  %386 = vmatpush2.msra.mxu0 0.0
  %387 = vmatprep.mubr.f32.mxu0 0.0
  %388 = vmatmul.mubr.f32.gmra.mxu0 %v308
  %v389 = vpop.f32.mrf.mxu0
  %v390 = vadd.f32 0.0, %v389
  %v391 = vpop.f32.mrf.mxu0
  %392 = vmatprep.mubr.f32.mxu0 0.0
  %393 = vmatmul.mubr.f32.gmra.mxu0 %v311
  %v394 = vpop.f32.mrf.mxu0
  %v395 = vadd.f32 0.0, %v394
  %v396 = vpop.f32.mrf.mxu0
  %397 = vmatprep.mubr.f32.mxu0 0.0
  %398 = vmatmul.mubr.f32.gmra.mxu0 %v314
  %v399 = vpop.f32.mrf.mxu0
  %v400 = vadd.f32 0.0, %v399
  %v401 = vpop.f32.mrf.mxu0
  %402 = vmatprep.mubr.f32.mxu0 0.0
  %403 = vmatmul.mubr.f32.gmra.mxu0 %v317
  %v404 = vpop.f32.mrf.mxu0
  %v405 = vadd.f32 0.0, %v404
  %v406 = vpop.f32.mrf.mxu0
  %407 = vdwg.mxu0
  %v409 = vsel %vm306, %v33, 0
  %v412 = vsel %vm306, %v34, 0
  %v415 = vsel %vm306, %v35, 0
  %v418 = vsel %vm306, %v36, 0
  %v421 = vsel %vm319, %v283, 0
  %423 = vmatprep.subr.mxu0 0.0
  %424 = vmatpush1.msra.mxu0 0.0
  %425 = vmatprep.subr.mxu0 0.0
  %426 = vmatpush1.msra.mxu0 0.0
  %427 = vmatprep.subr.mxu0 0.0
  %428 = vmatpush1.msra.mxu0 0.0
  %429 = vmatprep.subr.mxu0 0.0
  %430 = vmatpush1.msra.mxu0 0.0
  %431 = vmatprep.subr.mxu0 0.0
  %432 = vmatpush1.msra.mxu0 0.0
  %433 = vmatprep.subr.mxu0 0.0
  %434 = vmatpush1.msra.mxu0 0.0
  %435 = vmatprep.subr.mxu0 0.0
  %436 = vmatpush1.msra.mxu0 0.0
  %437 = vmatprep.subr.mxu0 0.0
  %438 = vmatpush1.msra.mxu0 0.0
  %439 = vmatprep.subr.mxu0 0.0
  %440 = vmatpush1.msra.mxu0 0.0
  %441 = vmatprep.subr.mxu0 0.0
  %442 = vmatpush1.msra.mxu0 0.0
  %443 = vmatprep.subr.mxu0 0.0
  %444 = vmatpush1.msra.mxu0 0.0
  %445 = vmatprep.subr.mxu0 0.0
  %446 = vmatpush1.msra.mxu0 0.0
  %447 = vmatprep.subr.mxu0 0.0
  %448 = vmatpush1.msra.mxu0 0.0
  %449 = vmatprep.subr.mxu0 0.0
  %450 = vmatpush1.msra.mxu0 %v421
  %451 = vmatprep.subr.mxu0 0.0
  %452 = vmatpush1.msra.mxu0 %v282
  %453 = vmatprep.subr.mxu0 0.0
  %454 = vmatpush1.msra.mxu0 %v281
  %455 = vmatprep.subr.mxu0 0.0
  %456 = vmatpush2.msra.mxu0 0.0
  %457 = vmatprep.subr.mxu0 0.0
  %458 = vmatpush2.msra.mxu0 0.0
  %459 = vmatprep.subr.mxu0 0.0
  %460 = vmatpush2.msra.mxu0 0.0
  %461 = vmatprep.subr.mxu0 0.0
  %462 = vmatpush2.msra.mxu0 0.0
  %463 = vmatprep.subr.mxu0 0.0
  %464 = vmatpush2.msra.mxu0 0.0
  %465 = vmatprep.subr.mxu0 0.0
  %466 = vmatpush2.msra.mxu0 0.0
  %467 = vmatprep.subr.mxu0 0.0
  %468 = vmatpush2.msra.mxu0 0.0
  %469 = vmatprep.subr.mxu0 0.0
  %470 = vmatpush2.msra.mxu0 0.0
  %471 = vmatprep.subr.mxu0 0.0
  %472 = vmatpush2.msra.mxu0 0.0
  %473 = vmatprep.subr.mxu0 0.0
  %474 = vmatpush2.msra.mxu0 0.0
  %475 = vmatprep.subr.mxu0 0.0
  %476 = vmatpush2.msra.mxu0 0.0
  %477 = vmatprep.subr.mxu0 0.0
  %478 = vmatpush2.msra.mxu0 0.0
  %479 = vmatprep.subr.mxu0 0.0
  %480 = vmatpush2.msra.mxu0 0.0
  %481 = vmatprep.subr.mxu0 0.0
  %482 = vmatpush2.msra.mxu0 0.0
  %483 = vmatprep.subr.mxu0 0.0
  %484 = vmatpush2.msra.mxu0 0.0
  %485 = vmatprep.subr.mxu0 0.0
  %486 = vmatpush2.msra.mxu0 0.0
  %487 = vmatprep.mubr.f32.mxu0 0.0
  %488 = vmatmul.mubr.f32.gmra.mxu0 %v409
  %v489 = vpop.f32.mrf.mxu0
  %v490 = vadd.f32 %v390, %v489
  %v491 = vpop.f32.mrf.mxu0
  %492 = vmatprep.mubr.f32.mxu0 0.0
  %493 = vmatmul.mubr.f32.gmra.mxu0 %v412
  %v494 = vpop.f32.mrf.mxu0
  %v495 = vadd.f32 %v395, %v494
  %v496 = vpop.f32.mrf.mxu0
  %497 = vmatprep.mubr.f32.mxu0 0.0
  %498 = vmatmul.mubr.f32.gmra.mxu0 %v415
  %v499 = vpop.f32.mrf.mxu0
  %v500 = vadd.f32 %v400, %v499
  %v501 = vpop.f32.mrf.mxu0
  %502 = vmatprep.mubr.f32.mxu0 0.0
  %503 = vmatmul.mubr.f32.gmra.mxu0 %v418
  %v504 = vpop.f32.mrf.mxu0
  %v505 = vadd.f32 %v405, %v504
  %v506 = vpop.f32.mrf.mxu0
  %507 = vdwg.mxu0
  %508 = vst [vmem:[%s7] sm:$0xff] %v490
  %509 = vst [vmem:[%s7 + $0x8] sm:$0xff] %v495
  %510 = vst [vmem:[%s7 + $0x10] sm:$0xff] %v500
  %511 = vst [vmem:[%s7 + $0x18] sm:$0xff] %v505
  %v512 = vlaneseq
  %v513 = vshrl.u32 %v512, 7
  %v514 = vsub.s32 1, %v513
  %v515 = vrot.slane %v45, %v514
  %517 = vbcast.lane.b32.xlu0 %v515, 256
  %v518 = vpop.permute.xlu0 %517
  %s520 = sor.u32 256, 8
  %521 = vbcast.lane.b32.xlu0 %v515, %s520
  %v522 = vpop.permute.xlu0 %521
  %s524 = sor.u32 256, 16
  %525 = vbcast.lane.b32.xlu0 %v515, %s524
  %v526 = vpop.permute.xlu0 %525
  %s528 = sor.u32 256, 24
  %529 = vbcast.lane.b32.xlu0 %v515, %s528
  %v530 = vpop.permute.xlu0 %529
  %v531 = vmul.f32 %v518, %v69
  %v532 = vmul.f32 %v522, %v69
  %v533 = vmul.f32 %v526, %v69
  %v534 = vmul.f32 %v530, %v69
  %535 = vmatprep.subr.mxu0 0.0
  %536 = vmatpush1.msra.mxu0 0.0
  %537 = vmatprep.subr.mxu0 0.0
  %538 = vmatpush1.msra.mxu0 0.0
  %539 = vmatprep.subr.mxu0 0.0
  %540 = vmatpush1.msra.mxu0 0.0
  %541 = vmatprep.subr.mxu0 0.0
  %542 = vmatpush1.msra.mxu0 0.0
  %543 = vmatprep.subr.mxu0 0.0
  %544 = vmatpush1.msra.mxu0 0.0
  %545 = vmatprep.subr.mxu0 0.0
  %546 = vmatpush1.msra.mxu0 0.0
  %547 = vmatprep.subr.mxu0 0.0
  %548 = vmatpush1.msra.mxu0 0.0
  %549 = vmatprep.subr.mxu0 0.0
  %550 = vmatpush1.msra.mxu0 0.0
  %551 = vmatprep.subr.mxu0 0.0
  %552 = vmatpush1.msra.mxu0 0.0
  %553 = vmatprep.subr.mxu0 0.0
  %554 = vmatpush1.msra.mxu0 0.0
  %555 = vmatprep.subr.mxu0 0.0
  %556 = vmatpush1.msra.mxu0 0.0
  %557 = vmatprep.subr.mxu0 0.0
  %558 = vmatpush1.msra.mxu0 0.0
  %559 = vmatprep.subr.mxu0 0.0
  %560 = vmatpush1.msra.mxu0 %v534
  %561 = vmatprep.subr.mxu0 0.0
  %562 = vmatpush1.msra.mxu0 %v533
  %563 = vmatprep.subr.mxu0 0.0
  %564 = vmatpush1.msra.mxu0 %v532
  %565 = vmatprep.subr.mxu0 0.0
  %566 = vmatpush1.msra.mxu0 %v531
  %567 = vmatprep.subr.mxu0 0.0
  %568 = vmatpush2.msra.mxu0 0.0
  %569 = vmatprep.subr.mxu0 0.0
  %570 = vmatpush2.msra.mxu0 0.0
  %571 = vmatprep.subr.mxu0 0.0
  %572 = vmatpush2.msra.mxu0 0.0
  %573 = vmatprep.subr.mxu0 0.0
  %574 = vmatpush2.msra.mxu0 0.0
  %575 = vmatprep.subr.mxu0 0.0
  %576 = vmatpush2.msra.mxu0 0.0
  %577 = vmatprep.subr.mxu0 0.0
  %578 = vmatpush2.msra.mxu0 0.0
  %579 = vmatprep.subr.mxu0 0.0
  %580 = vmatpush2.msra.mxu0 0.0
  %581 = vmatprep.subr.mxu0 0.0
  %582 = vmatpush2.msra.mxu0 0.0
  %583 = vmatprep.subr.mxu0 0.0
  %584 = vmatpush2.msra.mxu0 0.0
  %585 = vmatprep.subr.mxu0 0.0
  %586 = vmatpush2.msra.mxu0 0.0
  %587 = vmatprep.subr.mxu0 0.0
  %588 = vmatpush2.msra.mxu0 0.0
  %589 = vmatprep.subr.mxu0 0.0
  %590 = vmatpush2.msra.mxu0 0.0
  %591 = vmatprep.subr.mxu0 0.0
  %592 = vmatpush2.msra.mxu0 0.0
  %593 = vmatprep.subr.mxu0 0.0
  %594 = vmatpush2.msra.mxu0 0.0
  %595 = vmatprep.subr.mxu0 0.0
  %596 = vmatpush2.msra.mxu0 0.0
  %597 = vmatprep.subr.mxu0 0.0
  %598 = vmatpush2.msra.mxu0 0.0
  %599 = vmatprep.mubr.f32.mxu0 0.0
  %600 = vmatmul.mubr.f32.gmra.mxu0 %v77
  %v601 = vpop.f32.mrf.mxu0
  %v602 = vadd.f32 0.0, %v601
  %v603 = vpop.f32.mrf.mxu0
  %604 = vmatprep.mubr.f32.mxu0 0.0
  %605 = vmatmul.mubr.f32.gmra.mxu0 %v80
  %v606 = vpop.f32.mrf.mxu0
  %v607 = vadd.f32 0.0, %v606
  %v608 = vpop.f32.mrf.mxu0
  %609 = vmatprep.mubr.f32.mxu0 0.0
  %610 = vmatmul.mubr.f32.gmra.mxu0 %v83
  %v611 = vpop.f32.mrf.mxu0
  %v612 = vadd.f32 0.0, %v611
  %v613 = vpop.f32.mrf.mxu0
  %614 = vdwg.mxu0
  %615 = vmatprep.subr.mxu0 0.0
  %616 = vmatpush1.msra.mxu0 0.0
  %617 = vmatprep.subr.mxu0 0.0
  %618 = vmatpush1.msra.mxu0 0.0
  %619 = vmatprep.subr.mxu0 0.0
  %620 = vmatpush1.msra.mxu0 0.0
  %621 = vmatprep.subr.mxu0 0.0
  %622 = vmatpush1.msra.mxu0 0.0
  %623 = vmatprep.subr.mxu0 0.0
  %624 = vmatpush1.msra.mxu0 0.0
  %625 = vmatprep.subr.mxu0 0.0
  %626 = vmatpush1.msra.mxu0 0.0
  %627 = vmatprep.subr.mxu0 0.0
  %628 = vmatpush1.msra.mxu0 0.0
  %629 = vmatprep.subr.mxu0 0.0
  %630 = vmatpush1.msra.mxu0 0.0
  %631 = vmatprep.subr.mxu0 0.0
  %632 = vmatpush1.msra.mxu0 0.0
  %633 = vmatprep.subr.mxu0 0.0
  %634 = vmatpush1.msra.mxu0 0.0
  %635 = vmatprep.subr.mxu0 0.0
  %636 = vmatpush1.msra.mxu0 0.0
  %637 = vmatprep.subr.mxu0 0.0
  %638 = vmatpush1.msra.mxu0 0.0
  %639 = vmatprep.subr.mxu0 0.0
  %640 = vmatpush1.msra.mxu0 %v534
  %641 = vmatprep.subr.mxu0 0.0
  %642 = vmatpush1.msra.mxu0 %v533
  %643 = vmatprep.subr.mxu0 0.0
  %644 = vmatpush1.msra.mxu0 %v532
  %645 = vmatprep.subr.mxu0 0.0
  %646 = vmatpush1.msra.mxu0 %v531
  %647 = vmatprep.subr.mxu0 0.0
  %648 = vmatpush2.msra.mxu0 0.0
  %649 = vmatprep.subr.mxu0 0.0
  %650 = vmatpush2.msra.mxu0 0.0
  %651 = vmatprep.subr.mxu0 0.0
  %652 = vmatpush2.msra.mxu0 0.0
  %653 = vmatprep.subr.mxu0 0.0
  %654 = vmatpush2.msra.mxu0 0.0
  %655 = vmatprep.subr.mxu0 0.0
  %656 = vmatpush2.msra.mxu0 0.0
  %657 = vmatprep.subr.mxu0 0.0
  %658 = vmatpush2.msra.mxu0 0.0
  %659 = vmatprep.subr.mxu0 0.0
  %660 = vmatpush2.msra.mxu0 0.0
  %661 = vmatprep.subr.mxu0 0.0
  %662 = vmatpush2.msra.mxu0 0.0
  %663 = vmatprep.subr.mxu0 0.0
  %664 = vmatpush2.msra.mxu0 0.0
  %665 = vmatprep.subr.mxu0 0.0
  %666 = vmatpush2.msra.mxu0 0.0
  %667 = vmatprep.subr.mxu0 0.0
  %668 = vmatpush2.msra.mxu0 0.0
  %669 = vmatprep.subr.mxu0 0.0
  %670 = vmatpush2.msra.mxu0 0.0
  %671 = vmatprep.subr.mxu0 0.0
  %672 = vmatpush2.msra.mxu0 0.0
  %673 = vmatprep.subr.mxu0 0.0
  %674 = vmatpush2.msra.mxu0 0.0
  %675 = vmatprep.subr.mxu0 0.0
  %676 = vmatpush2.msra.mxu0 0.0
  %677 = vmatprep.subr.mxu0 0.0
  %678 = vmatpush2.msra.mxu0 0.0
  %679 = vmatprep.mubr.f32.mxu0 0.0
  %680 = vmatmul.mubr.f32.gmra.mxu0 %v166
  %v681 = vpop.f32.mrf.mxu0
  %v682 = vadd.f32 0.0, %v681
  %v683 = vpop.f32.mrf.mxu0
  %684 = vmatprep.mubr.f32.mxu0 0.0
  %685 = vmatmul.mubr.f32.gmra.mxu0 %v169
  %v686 = vpop.f32.mrf.mxu0
  %v687 = vadd.f32 0.0, %v686
  %v688 = vpop.f32.mrf.mxu0
  %689 = vmatprep.mubr.f32.mxu0 0.0
  %690 = vmatmul.mubr.f32.gmra.mxu0 %v172
  %v691 = vpop.f32.mrf.mxu0
  %v692 = vadd.f32 0.0, %v691
  %v693 = vpop.f32.mrf.mxu0
  %694 = vdwg.mxu0
  %v695 = vmul.f32 %v602, %v257
  %v696 = vmul.f32 %v607, %v257
  %v697 = vmul.f32 %v612, %v257
  %v698 = vmul.f32 %v682, %v264
  %v699 = vmul.f32 %v687, %v264
  %v700 = vmul.f32 %v692, %v264
  %v701 = vsub.f32 %v695, %v698
  %v702 = vsub.f32 %v696, %v699
  %v703 = vsub.f32 %v697, %v700
  %v704 = vadd.f32 %v701, %v274
  %v705 = vadd.f32 %v702, %v274
  %v706 = vadd.f32 %v703, %v274
  %v707 = vsub.f32 %v704, 0.01
  %v708 = vsub.f32 %v705, 0.01
  %v709 = vsub.f32 %v706, 0.01
  %v710 = vmax.f32 %v707, 0.0
  %v711 = vmax.f32 %v708, 0.0
  %v712 = vmax.f32 %v709, 0.0
  %v713 = vmul.f32 %v682, %v257
  %v714 = vmul.f32 %v687, %v257
  %v715 = vmul.f32 %v692, %v257
  %v716 = vmul.f32 %v602, %v264
  %v717 = vmul.f32 %v607, %v264
  %v718 = vmul.f32 %v612, %v264
  %v719 = vadd.f32 %v713, %v716
  %v720 = vadd.f32 %v714, %v717
  %v721 = vadd.f32 %v715, %v718
  %v722 = vadd.f32 %v719, %v296
  %v723 = vadd.f32 %v720, %v296
  %v724 = vadd.f32 %v721, %v296
  %v725 = vsub.f32 %v722, 0.01
  %v726 = vsub.f32 %v723, 0.01
  %v727 = vsub.f32 %v724, 0.01
  %v728 = vmax.f32 %v725, 0.0
  %v729 = vmax.f32 %v726, 0.0
  %v730 = vmax.f32 %v727, 0.0
  %v732 = vsel %vm319, %v730, 0
  %734 = vmatprep.subr.mxu0 0.0
  %735 = vmatpush1.msra.mxu0 0.0
  %736 = vmatprep.subr.mxu0 0.0
  %737 = vmatpush1.msra.mxu0 0.0
  %738 = vmatprep.subr.mxu0 0.0
  %739 = vmatpush1.msra.mxu0 0.0
  %740 = vmatprep.subr.mxu0 0.0
  %741 = vmatpush1.msra.mxu0 0.0
  %742 = vmatprep.subr.mxu0 0.0
  %743 = vmatpush1.msra.mxu0 0.0
  %744 = vmatprep.subr.mxu0 0.0
  %745 = vmatpush1.msra.mxu0 0.0
  %746 = vmatprep.subr.mxu0 0.0
  %747 = vmatpush1.msra.mxu0 0.0
  %748 = vmatprep.subr.mxu0 0.0
  %749 = vmatpush1.msra.mxu0 0.0
  %750 = vmatprep.subr.mxu0 0.0
  %751 = vmatpush1.msra.mxu0 0.0
  %752 = vmatprep.subr.mxu0 0.0
  %753 = vmatpush1.msra.mxu0 0.0
  %754 = vmatprep.subr.mxu0 0.0
  %755 = vmatpush1.msra.mxu0 0.0
  %756 = vmatprep.subr.mxu0 0.0
  %757 = vmatpush1.msra.mxu0 0.0
  %758 = vmatprep.subr.mxu0 0.0
  %759 = vmatpush1.msra.mxu0 0.0
  %760 = vmatprep.subr.mxu0 0.0
  %761 = vmatpush1.msra.mxu0 %v732
  %762 = vmatprep.subr.mxu0 0.0
  %763 = vmatpush1.msra.mxu0 %v729
  %764 = vmatprep.subr.mxu0 0.0
  %765 = vmatpush1.msra.mxu0 %v728
  %766 = vmatprep.subr.mxu0 0.0
  %767 = vmatpush2.msra.mxu0 0.0
  %768 = vmatprep.subr.mxu0 0.0
  %769 = vmatpush2.msra.mxu0 0.0
  %770 = vmatprep.subr.mxu0 0.0
  %771 = vmatpush2.msra.mxu0 0.0
  %772 = vmatprep.subr.mxu0 0.0
  %773 = vmatpush2.msra.mxu0 0.0
  %774 = vmatprep.subr.mxu0 0.0
  %775 = vmatpush2.msra.mxu0 0.0
  %776 = vmatprep.subr.mxu0 0.0
  %777 = vmatpush2.msra.mxu0 0.0
  %778 = vmatprep.subr.mxu0 0.0
  %779 = vmatpush2.msra.mxu0 0.0
  %780 = vmatprep.subr.mxu0 0.0
  %781 = vmatpush2.msra.mxu0 0.0
  %782 = vmatprep.subr.mxu0 0.0
  %783 = vmatpush2.msra.mxu0 0.0
  %784 = vmatprep.subr.mxu0 0.0
  %785 = vmatpush2.msra.mxu0 0.0
  %786 = vmatprep.subr.mxu0 0.0
  %787 = vmatpush2.msra.mxu0 0.0
  %788 = vmatprep.subr.mxu0 0.0
  %789 = vmatpush2.msra.mxu0 0.0
  %790 = vmatprep.subr.mxu0 0.0
  %791 = vmatpush2.msra.mxu0 0.0
  %792 = vmatprep.subr.mxu0 0.0
  %793 = vmatpush2.msra.mxu0 0.0
  %794 = vmatprep.subr.mxu0 0.0
  %795 = vmatpush2.msra.mxu0 0.0
  %796 = vmatprep.subr.mxu0 0.0
  %797 = vmatpush2.msra.mxu0 0.0
  %798 = vmatprep.mubr.f32.mxu0 0.0
  %799 = vmatmul.mubr.f32.gmra.mxu0 %v308
  %v800 = vpop.f32.mrf.mxu0
  %v801 = vadd.f32 0.0, %v800
  %v802 = vpop.f32.mrf.mxu0
  %803 = vmatprep.mubr.f32.mxu0 0.0
  %804 = vmatmul.mubr.f32.gmra.mxu0 %v311
  %v805 = vpop.f32.mrf.mxu0
  %v806 = vadd.f32 0.0, %v805
  %v807 = vpop.f32.mrf.mxu0
  %808 = vmatprep.mubr.f32.mxu0 0.0
  %809 = vmatmul.mubr.f32.gmra.mxu0 %v314
  %v810 = vpop.f32.mrf.mxu0
  %v811 = vadd.f32 0.0, %v810
  %v812 = vpop.f32.mrf.mxu0
  %813 = vmatprep.mubr.f32.mxu0 0.0
  %814 = vmatmul.mubr.f32.gmra.mxu0 %v317
  %v815 = vpop.f32.mrf.mxu0
  %v816 = vadd.f32 0.0, %v815
  %v817 = vpop.f32.mrf.mxu0
  %818 = vdwg.mxu0
  %v820 = vsel %vm319, %v712, 0
  %822 = vmatprep.subr.mxu0 0.0
  %823 = vmatpush1.msra.mxu0 0.0
  %824 = vmatprep.subr.mxu0 0.0
  %825 = vmatpush1.msra.mxu0 0.0
  %826 = vmatprep.subr.mxu0 0.0
  %827 = vmatpush1.msra.mxu0 0.0
  %828 = vmatprep.subr.mxu0 0.0
  %829 = vmatpush1.msra.mxu0 0.0
  %830 = vmatprep.subr.mxu0 0.0
  %831 = vmatpush1.msra.mxu0 0.0
  %832 = vmatprep.subr.mxu0 0.0
  %833 = vmatpush1.msra.mxu0 0.0
  %834 = vmatprep.subr.mxu0 0.0
  %835 = vmatpush1.msra.mxu0 0.0
  %836 = vmatprep.subr.mxu0 0.0
  %837 = vmatpush1.msra.mxu0 0.0
  %838 = vmatprep.subr.mxu0 0.0
  %839 = vmatpush1.msra.mxu0 0.0
  %840 = vmatprep.subr.mxu0 0.0
  %841 = vmatpush1.msra.mxu0 0.0
  %842 = vmatprep.subr.mxu0 0.0
  %843 = vmatpush1.msra.mxu0 0.0
  %844 = vmatprep.subr.mxu0 0.0
  %845 = vmatpush1.msra.mxu0 0.0
  %846 = vmatprep.subr.mxu0 0.0
  %847 = vmatpush1.msra.mxu0 0.0
  %848 = vmatprep.subr.mxu0 0.0
  %849 = vmatpush1.msra.mxu0 %v820
  %850 = vmatprep.subr.mxu0 0.0
  %851 = vmatpush1.msra.mxu0 %v711
  %852 = vmatprep.subr.mxu0 0.0
  %853 = vmatpush1.msra.mxu0 %v710
  %854 = vmatprep.subr.mxu0 0.0
  %855 = vmatpush2.msra.mxu0 0.0
  %856 = vmatprep.subr.mxu0 0.0
  %857 = vmatpush2.msra.mxu0 0.0
  %858 = vmatprep.subr.mxu0 0.0
  %859 = vmatpush2.msra.mxu0 0.0
  %860 = vmatprep.subr.mxu0 0.0
  %861 = vmatpush2.msra.mxu0 0.0
  %862 = vmatprep.subr.mxu0 0.0
  %863 = vmatpush2.msra.mxu0 0.0
  %864 = vmatprep.subr.mxu0 0.0
  %865 = vmatpush2.msra.mxu0 0.0
  %866 = vmatprep.subr.mxu0 0.0
  %867 = vmatpush2.msra.mxu0 0.0
  %868 = vmatprep.subr.mxu0 0.0
  %869 = vmatpush2.msra.mxu0 0.0
  %870 = vmatprep.subr.mxu0 0.0
  %871 = vmatpush2.msra.mxu0 0.0
  %872 = vmatprep.subr.mxu0 0.0
  %873 = vmatpush2.msra.mxu0 0.0
  %874 = vmatprep.subr.mxu0 0.0
  %875 = vmatpush2.msra.mxu0 0.0
  %876 = vmatprep.subr.mxu0 0.0
  %877 = vmatpush2.msra.mxu0 0.0
  %878 = vmatprep.subr.mxu0 0.0
  %879 = vmatpush2.msra.mxu0 0.0
  %880 = vmatprep.subr.mxu0 0.0
  %881 = vmatpush2.msra.mxu0 0.0
  %882 = vmatprep.subr.mxu0 0.0
  %883 = vmatpush2.msra.mxu0 0.0
  %884 = vmatprep.subr.mxu0 0.0
  %885 = vmatpush2.msra.mxu0 0.0
  %886 = vmatprep.mubr.f32.mxu0 0.0
  %887 = vmatmul.mubr.f32.gmra.mxu0 %v409
  %v888 = vpop.f32.mrf.mxu0
  %v889 = vadd.f32 %v801, %v888
  %v890 = vpop.f32.mrf.mxu0
  %891 = vmatprep.mubr.f32.mxu0 0.0
  %892 = vmatmul.mubr.f32.gmra.mxu0 %v412
  %v893 = vpop.f32.mrf.mxu0
  %v894 = vadd.f32 %v806, %v893
  %v895 = vpop.f32.mrf.mxu0
  %896 = vmatprep.mubr.f32.mxu0 0.0
  %897 = vmatmul.mubr.f32.gmra.mxu0 %v415
  %v898 = vpop.f32.mrf.mxu0
  %v899 = vadd.f32 %v811, %v898
  %v900 = vpop.f32.mrf.mxu0
  %901 = vmatprep.mubr.f32.mxu0 0.0
  %902 = vmatmul.mubr.f32.gmra.mxu0 %v418
  %v903 = vpop.f32.mrf.mxu0
  %v904 = vadd.f32 %v816, %v903
  %v905 = vpop.f32.mrf.mxu0
  %906 = vdwg.mxu0
  %s907 = scalar_lea.vmem %s7, 32
  %908 = vst [vmem:[%s907] sm:$0xff] %v889
  %909 = vst [vmem:[%s907 + $0x8] sm:$0xff] %v894
  %910 = vst [vmem:[%s907 + $0x10] sm:$0xff] %v899
  %911 = vst [vmem:[%s907 + $0x18] sm:$0xff] %v904
  // Predicated region
  $region30: #{_lambda_.2} parent=0 // pred_check
    _
  $region31: #{_lambda_.2} parent=0 // pred_check_branch
    %913 = sbr.rel (0) target = $region33
  $region32: #{_lambda_.2} parent=0 // pred_region
    _
  $region33: #{_lambda_.2} parent=0 // pred_fallthru
    _
  // Predicated region
  $region34: #{_lambda_.2} parent=0 // pred_check
    _
  $region35: #{_lambda_.2} parent=0 // pred_check_branch
    %915 = sbr.rel (0) target = $region37
  $region36: #{_lambda_.2} parent=0 // pred_region
    _
  $region37: #{_lambda_.2} parent=0 // pred_fallthru
    _

// kernel: _lambda_.3
$region0: #{_lambda_.3}
  #allocation0 [shape = 'u32[]', space=smem, size = 0x4, offset = 0x4, fixed_abs, tag = 'smem constant byte address 0x4 - core index']
  #allocation1 [shape = 'u32[144,128]{1,0:T(1,128)}', space=vmem, size = 0x12000, scoped, tag = 'internal scratch']
  %s0 = inlined_call_operand.vmem [shape: f32[8,1024], index: 0, kind: input, shape index: {}]
  %s1 = inlined_call_operand.vmem [shape: f32[1024,256], index: 1, kind: input, shape index: {}]
  %s2 = inlined_call_operand.vmem [shape: f32[1,256], index: 2, kind: input, shape index: {}]
  %s3 = inlined_call_operand.vmem [shape: f32[256,128], index: 3, kind: input, shape index: {}]
  %s4 = inlined_call_operand.vmem [shape: f32[1,128], index: 4, kind: input, shape index: {}]
  %s5 = inlined_call_operand.vmem [shape: f32[8,128], index: 5, kind: output, shape index: {}]
  %s6 = sld [smem:[#allocation0]]
  $region30: #{_lambda_.3} parent=0
    _
  %s8 = ssub.s32 1, %s6
  %s9 = scalar_select 0, %s8, %s6
  // Predicated region
  $region2: #{_lambda_.3} parent=0 // pred_check
    _
  $region3: #{_lambda_.3} parent=0 // pred_check_branch
    %11 = sbr.rel (0) target = $region5
  $region4: #{_lambda_.3} parent=0 // pred_region
    _
  $region5: #{_lambda_.3} parent=0 // pred_fallthru
    _
  // Predicated region
  $region6: #{_lambda_.3} parent=0 // pred_check
    _
  $region7: #{_lambda_.3} parent=0 // pred_check_branch
    %13 = sbr.rel (0) target = $region9
  $region8: #{_lambda_.3} parent=0 // pred_region
    _
  $region9: #{_lambda_.3} parent=0 // pred_fallthru
    _
  // Predicated region
  $region10: #{_lambda_.3} parent=0 // pred_check
    _
  $region11: #{_lambda_.3} parent=0 // pred_check_branch
    %15 = sbr.rel (0) target = $region13
  $region12: #{_lambda_.3} parent=0 // pred_region
    _
  $region13: #{_lambda_.3} parent=0 // pred_fallthru
    _
  // Predicated region
  $region14: #{_lambda_.3} parent=0 // pred_check
    _
  $region15: #{_lambda_.3} parent=0 // pred_check_branch
    %17 = sbr.rel (0) target = $region17
  $region16: #{_lambda_.3} parent=0 // pred_region
    _
  $region17: #{_lambda_.3} parent=0 // pred_fallthru
    _
  // Predicated region
  $region18: #{_lambda_.3} parent=0 // pred_check
    _
  $region19: #{_lambda_.3} parent=0 // pred_check_branch
    %19 = sbr.rel (0) target = $region21
  $region20: #{_lambda_.3} parent=0 // pred_region
    _
  $region21: #{_lambda_.3} parent=0 // pred_fallthru
    _
  %v20 = vld [vmem:[%s0] sm:$0xff]
  %v21 = vld [vmem:[%s0 + $0x8] sm:$0xff]
  %v22 = vld [vmem:[%s0 + $0x10] sm:$0xff]
  %v23 = vld [vmem:[%s0 + $0x18] sm:$0xff]
  %v24 = vld [vmem:[%s0 + $0x20] sm:$0xff]
  %v25 = vld [vmem:[%s0 + $0x28] sm:$0xff]
  %v26 = vld [vmem:[%s0 + $0x30] sm:$0xff]
  %v27 = vld [vmem:[%s0 + $0x38] sm:$0xff]
  %v28 = vld [vmem:[%s1] sm:$0xff]
  %v29 = vld [vmem:[%s1 + $0x8] sm:$0xff]
  %v30 = vld [vmem:[%s1 + $0x10] sm:$0xff]
  %v31 = vld [vmem:[%s1 + $0x18] sm:$0xff]
  %v32 = vld [vmem:[%s1 + $0x20] sm:$0xff]
  %v33 = vld [vmem:[%s1 + $0x28] sm:$0xff]
  %v34 = vld [vmem:[%s1 + $0x30] sm:$0xff]
  %v35 = vld [vmem:[%s1 + $0x38] sm:$0xff]
  %v36 = vld [vmem:[%s1 + $0x40] sm:$0xff]
  %v37 = vld [vmem:[%s1 + $0x48] sm:$0xff]
  %v38 = vld [vmem:[%s1 + $0x50] sm:$0xff]
  %v39 = vld [vmem:[%s1 + $0x58] sm:$0xff]
  %v40 = vld [vmem:[%s1 + $0x60] sm:$0xff]
  %v41 = vld [vmem:[%s1 + $0x68] sm:$0xff]
  %v42 = vld [vmem:[%s1 + $0x70] sm:$0xff]
  %v43 = vld [vmem:[%s1 + $0x78] sm:$0xff]
  %v44 = vld [vmem:[%s1 + $0x80] sm:$0xff]
  %v45 = vld [vmem:[%s1 + $0x88] sm:$0xff]
  %v46 = vld [vmem:[%s1 + $0x90] sm:$0xff]
  %v47 = vld [vmem:[%s1 + $0x98] sm:$0xff]
  %v48 = vld [vmem:[%s1 + $0xa0] sm:$0xff]
  %v49 = vld [vmem:[%s1 + $0xa8] sm:$0xff]
  %v50 = vld [vmem:[%s1 + $0xb0] sm:$0xff]
  %v51 = vld [vmem:[%s1 + $0xb8] sm:$0xff]
  %v52 = vld [vmem:[%s1 + $0xc0] sm:$0xff]
  %v53 = vld [vmem:[%s1 + $0xc8] sm:$0xff]
  %v54 = vld [vmem:[%s1 + $0xd0] sm:$0xff]
  %v55 = vld [vmem:[%s1 + $0xd8] sm:$0xff]
  %v56 = vld [vmem:[%s1 + $0xe0] sm:$0xff]
  %v57 = vld [vmem:[%s1 + $0xe8] sm:$0xff]
  %v58 = vld [vmem:[%s1 + $0xf0] sm:$0xff]
  %v59 = vld [vmem:[%s1 + $0xf8] sm:$0xff]
  %v60 = vld [vmem:[%s1 + $0x100] sm:$0xff]
  %v61 = vld [vmem:[%s1 + $0x108] sm:$0xff]
  %v62 = vld [vmem:[%s1 + $0x110] sm:$0xff]
  %v63 = vld [vmem:[%s1 + $0x118] sm:$0xff]
  %v64 = vld [vmem:[%s1 + $0x120] sm:$0xff]
  %v65 = vld [vmem:[%s1 + $0x128] sm:$0xff]
  %v66 = vld [vmem:[%s1 + $0x130] sm:$0xff]
  %v67 = vld [vmem:[%s1 + $0x138] sm:$0xff]
  %v68 = vld [vmem:[%s1 + $0x140] sm:$0xff]
  %v69 = vld [vmem:[%s1 + $0x148] sm:$0xff]
  %v70 = vld [vmem:[%s1 + $0x150] sm:$0xff]
  %v71 = vld [vmem:[%s1 + $0x158] sm:$0xff]
  %v72 = vld [vmem:[%s1 + $0x160] sm:$0xff]
  %v73 = vld [vmem:[%s1 + $0x168] sm:$0xff]
  %v74 = vld [vmem:[%s1 + $0x170] sm:$0xff]
  %v75 = vld [vmem:[%s1 + $0x178] sm:$0xff]
  %v76 = vld [vmem:[%s1 + $0x180] sm:$0xff]
  %v77 = vld [vmem:[%s1 + $0x188] sm:$0xff]
  %v78 = vld [vmem:[%s1 + $0x190] sm:$0xff]
  %v79 = vld [vmem:[%s1 + $0x198] sm:$0xff]
  %v80 = vld [vmem:[%s1 + $0x1a0] sm:$0xff]
  %v81 = vld [vmem:[%s1 + $0x1a8] sm:$0xff]
  %v82 = vld [vmem:[%s1 + $0x1b0] sm:$0xff]
  %v83 = vld [vmem:[%s1 + $0x1b8] sm:$0xff]
  %v84 = vld [vmem:[%s1 + $0x1c0] sm:$0xff]
  %v85 = vld [vmem:[%s1 + $0x1c8] sm:$0xff]
  %v86 = vld [vmem:[%s1 + $0x1d0] sm:$0xff]
  %v87 = vld [vmem:[%s1 + $0x1d8] sm:$0xff]
  %v88 = vld [vmem:[%s1 + $0x1e0] sm:$0xff]
  %v89 = vld [vmem:[%s1 + $0x1e8] sm:$0xff]
  %v90 = vld [vmem:[%s1 + $0x1f0] sm:$0xff]
  %v91 = vld [vmem:[%s1 + $0x1f8] sm:$0xff]
  %v92 = vld [vmem:[%s1 + $0x200] sm:$0xff]
  %v93 = vld [vmem:[%s1 + $0x208] sm:$0xff]
  %v94 = vld [vmem:[%s1 + $0x210] sm:$0xff]
  %v95 = vld [vmem:[%s1 + $0x218] sm:$0xff]
  %v96 = vld [vmem:[%s1 + $0x220] sm:$0xff]
  %v97 = vld [vmem:[%s1 + $0x228] sm:$0xff]
  %v98 = vld [vmem:[%s1 + $0x230] sm:$0xff]
  %v99 = vld [vmem:[%s1 + $0x238] sm:$0xff]
  %v100 = vld [vmem:[%s1 + $0x240] sm:$0xff]
  %v101 = vld [vmem:[%s1 + $0x248] sm:$0xff]
  %v102 = vld [vmem:[%s1 + $0x250] sm:$0xff]
  %v103 = vld [vmem:[%s1 + $0x258] sm:$0xff]
  %v104 = vld [vmem:[%s1 + $0x260] sm:$0xff]
  %v105 = vld [vmem:[%s1 + $0x268] sm:$0xff]
  %v106 = vld [vmem:[%s1 + $0x270] sm:$0xff]
  %v107 = vld [vmem:[%s1 + $0x278] sm:$0xff]
  %v108 = vld [vmem:[%s1 + $0x280] sm:$0xff]
  %v109 = vld [vmem:[%s1 + $0x288] sm:$0xff]
  %v110 = vld [vmem:[%s1 + $0x290] sm:$0xff]
  %v111 = vld [vmem:[%s1 + $0x298] sm:$0xff]
  %v112 = vld [vmem:[%s1 + $0x2a0] sm:$0xff]
  %v113 = vld [vmem:[%s1 + $0x2a8] sm:$0xff]
  %v114 = vld [vmem:[%s1 + $0x2b0] sm:$0xff]
  %v115 = vld [vmem:[%s1 + $0x2b8] sm:$0xff]
  %v116 = vld [vmem:[%s1 + $0x2c0] sm:$0xff]
  %v117 = vld [vmem:[%s1 + $0x2c8] sm:$0xff]
  %v118 = vld [vmem:[%s1 + $0x2d0] sm:$0xff]
  %v119 = vld [vmem:[%s1 + $0x2d8] sm:$0xff]
  %v120 = vld [vmem:[%s1 + $0x2e0] sm:$0xff]
  %v121 = vld [vmem:[%s1 + $0x2e8] sm:$0xff]
  %v122 = vld [vmem:[%s1 + $0x2f0] sm:$0xff]
  %v123 = vld [vmem:[%s1 + $0x2f8] sm:$0xff]
  %v124 = vld [vmem:[%s1 + $0x300] sm:$0xff]
  %v125 = vld [vmem:[%s1 + $0x308] sm:$0xff]
  %v126 = vld [vmem:[%s1 + $0x310] sm:$0xff]
  %v127 = vld [vmem:[%s1 + $0x318] sm:$0xff]
  %v128 = vld [vmem:[%s1 + $0x320] sm:$0xff]
  %v129 = vld [vmem:[%s1 + $0x328] sm:$0xff]
  %v130 = vld [vmem:[%s1 + $0x330] sm:$0xff]
  %v131 = vld [vmem:[%s1 + $0x338] sm:$0xff]
  %v132 = vld [vmem:[%s1 + $0x340] sm:$0xff]
  %v133 = vld [vmem:[%s1 + $0x348] sm:$0xff]
  %v134 = vld [vmem:[%s1 + $0x350] sm:$0xff]
  %v135 = vld [vmem:[%s1 + $0x358] sm:$0xff]
  %v136 = vld [vmem:[%s1 + $0x360] sm:$0xff]
  %v137 = vld [vmem:[%s1 + $0x368] sm:$0xff]
  %v138 = vld [vmem:[%s1 + $0x370] sm:$0xff]
  %v139 = vld [vmem:[%s1 + $0x378] sm:$0xff]
  %v140 = vld [vmem:[%s1 + $0x380] sm:$0xff]
  %v141 = vld [vmem:[%s1 + $0x388] sm:$0xff]
  %v142 = vld [vmem:[%s1 + $0x390] sm:$0xff]
  %v143 = vld [vmem:[%s1 + $0x398] sm:$0xff]
  %v144 = vld [vmem:[%s1 + $0x3a0] sm:$0xff]
  %v145 = vld [vmem:[%s1 + $0x3a8] sm:$0xff]
  %v146 = vld [vmem:[%s1 + $0x3b0] sm:$0xff]
  %v147 = vld [vmem:[%s1 + $0x3b8] sm:$0xff]
  %v148 = vld [vmem:[%s1 + $0x3c0] sm:$0xff]
  %v149 = vld [vmem:[%s1 + $0x3c8] sm:$0xff]
  %v150 = vld [vmem:[%s1 + $0x3d0] sm:$0xff]
  %v151 = vld [vmem:[%s1 + $0x3d8] sm:$0xff]
  %v152 = vld [vmem:[%s1 + $0x3e0] sm:$0xff]
  %v153 = vld [vmem:[%s1 + $0x3e8] sm:$0xff]
  %v154 = vld [vmem:[%s1 + $0x3f0] sm:$0xff]
  %v155 = vld [vmem:[%s1 + $0x3f8] sm:$0xff]
  %v156 = vld [vmem:[%s1 + $0x400] sm:$0xff]
  %v157 = vld [vmem:[%s1 + $0x408] sm:$0xff]
  %v158 = vld [vmem:[%s1 + $0x410] sm:$0xff]
  %v159 = vld [vmem:[%s1 + $0x418] sm:$0xff]
  %v160 = vld [vmem:[%s1 + $0x420] sm:$0xff]
  %v161 = vld [vmem:[%s1 + $0x428] sm:$0xff]
  %v162 = vld [vmem:[%s1 + $0x430] sm:$0xff]
  %v163 = vld [vmem:[%s1 + $0x438] sm:$0xff]
  %v164 = vld [vmem:[%s1 + $0x440] sm:$0xff]
  %v165 = vld [vmem:[%s1 + $0x448] sm:$0xff]
  %v166 = vld [vmem:[%s1 + $0x450] sm:$0xff]
  %v167 = vld [vmem:[%s1 + $0x458] sm:$0xff]
  %v168 = vld [vmem:[%s1 + $0x460] sm:$0xff]
  %v169 = vld [vmem:[%s1 + $0x468] sm:$0xff]
  %v170 = vld [vmem:[%s1 + $0x470] sm:$0xff]
  %v171 = vld [vmem:[%s1 + $0x478] sm:$0xff]
  %v172 = vld [vmem:[%s1 + $0x480] sm:$0xff]
  %v173 = vld [vmem:[%s1 + $0x488] sm:$0xff]
  %v174 = vld [vmem:[%s1 + $0x490] sm:$0xff]
  %v175 = vld [vmem:[%s1 + $0x498] sm:$0xff]
  %v176 = vld [vmem:[%s1 + $0x4a0] sm:$0xff]
  %v177 = vld [vmem:[%s1 + $0x4a8] sm:$0xff]
  %v178 = vld [vmem:[%s1 + $0x4b0] sm:$0xff]
  %v179 = vld [vmem:[%s1 + $0x4b8] sm:$0xff]
  %v180 = vld [vmem:[%s1 + $0x4c0] sm:$0xff]
  %v181 = vld [vmem:[%s1 + $0x4c8] sm:$0xff]
  %v182 = vld [vmem:[%s1 + $0x4d0] sm:$0xff]
  %v183 = vld [vmem:[%s1 + $0x4d8] sm:$0xff]
  %v184 = vld [vmem:[%s1 + $0x4e0] sm:$0xff]
  %v185 = vld [vmem:[%s1 + $0x4e8] sm:$0xff]
  %v186 = vld [vmem:[%s1 + $0x4f0] sm:$0xff]
  %v187 = vld [vmem:[%s1 + $0x4f8] sm:$0xff]
  %v188 = vld [vmem:[%s1 + $0x500] sm:$0xff]
  %v189 = vld [vmem:[%s1 + $0x508] sm:$0xff]
  %v190 = vld [vmem:[%s1 + $0x510] sm:$0xff]
  %v191 = vld [vmem:[%s1 + $0x518] sm:$0xff]
  %v192 = vld [vmem:[%s1 + $0x520] sm:$0xff]
  %v193 = vld [vmem:[%s1 + $0x528] sm:$0xff]
  %v194 = vld [vmem:[%s1 + $0x530] sm:$0xff]
  %v195 = vld [vmem:[%s1 + $0x538] sm:$0xff]
  %v196 = vld [vmem:[%s1 + $0x540] sm:$0xff]
  %v197 = vld [vmem:[%s1 + $0x548] sm:$0xff]
  %v198 = vld [vmem:[%s1 + $0x550] sm:$0xff]
  %v199 = vld [vmem:[%s1 + $0x558] sm:$0xff]
  %v200 = vld [vmem:[%s1 + $0x560] sm:$0xff]
  %v201 = vld [vmem:[%s1 + $0x568] sm:$0xff]
  %v202 = vld [vmem:[%s1 + $0x570] sm:$0xff]
  %v203 = vld [vmem:[%s1 + $0x578] sm:$0xff]
  %v204 = vld [vmem:[%s1 + $0x580] sm:$0xff]
  %v205 = vld [vmem:[%s1 + $0x588] sm:$0xff]
  %v206 = vld [vmem:[%s1 + $0x590] sm:$0xff]
  %v207 = vld [vmem:[%s1 + $0x598] sm:$0xff]
  %v208 = vld [vmem:[%s1 + $0x5a0] sm:$0xff]
  %v209 = vld [vmem:[%s1 + $0x5a8] sm:$0xff]
  %v210 = vld [vmem:[%s1 + $0x5b0] sm:$0xff]
  %v211 = vld [vmem:[%s1 + $0x5b8] sm:$0xff]
  %v212 = vld [vmem:[%s1 + $0x5c0] sm:$0xff]
  %v213 = vld [vmem:[%s1 + $0x5c8] sm:$0xff]
  %v214 = vld [vmem:[%s1 + $0x5d0] sm:$0xff]
  %v215 = vld [vmem:[%s1 + $0x5d8] sm:$0xff]
  %v216 = vld [vmem:[%s1 + $0x5e0] sm:$0xff]
  %v217 = vld [vmem:[%s1 + $0x5e8] sm:$0xff]
  %v218 = vld [vmem:[%s1 + $0x5f0] sm:$0xff]
  %v219 = vld [vmem:[%s1 + $0x5f8] sm:$0xff]
  %v220 = vld [vmem:[%s1 + $0x600] sm:$0xff]
  %v221 = vld [vmem:[%s1 + $0x608] sm:$0xff]
  %v222 = vld [vmem:[%s1 + $0x610] sm:$0xff]
  %v223 = vld [vmem:[%s1 + $0x618] sm:$0xff]
  %v224 = vld [vmem:[%s1 + $0x620] sm:$0xff]
  %v225 = vld [vmem:[%s1 + $0x628] sm:$0xff]
  %v226 = vld [vmem:[%s1 + $0x630] sm:$0xff]
  %v227 = vld [vmem:[%s1 + $0x638] sm:$0xff]
  %v228 = vld [vmem:[%s1 + $0x640] sm:$0xff]
  %v229 = vld [vmem:[%s1 + $0x648] sm:$0xff]
  %v230 = vld [vmem:[%s1 + $0x650] sm:$0xff]
  %v231 = vld [vmem:[%s1 + $0x658] sm:$0xff]
  %v232 = vld [vmem:[%s1 + $0x660] sm:$0xff]
  %v233 = vld [vmem:[%s1 + $0x668] sm:$0xff]
  %v234 = vld [vmem:[%s1 + $0x670] sm:$0xff]
  %v235 = vld [vmem:[%s1 + $0x678] sm:$0xff]
  %v236 = vld [vmem:[%s1 + $0x680] sm:$0xff]
  %v237 = vld [vmem:[%s1 + $0x688] sm:$0xff]
  %v238 = vld [vmem:[%s1 + $0x690] sm:$0xff]
  %v239 = vld [vmem:[%s1 + $0x698] sm:$0xff]
  %v240 = vld [vmem:[%s1 + $0x6a0] sm:$0xff]
  %v241 = vld [vmem:[%s1 + $0x6a8] sm:$0xff]
  %v242 = vld [vmem:[%s1 + $0x6b0] sm:$0xff]
  %v243 = vld [vmem:[%s1 + $0x6b8] sm:$0xff]
  %v244 = vld [vmem:[%s1 + $0x6c0] sm:$0xff]
  %v245 = vld [vmem:[%s1 + $0x6c8] sm:$0xff]
  %v246 = vld [vmem:[%s1 + $0x6d0] sm:$0xff]
  %v247 = vld [vmem:[%s1 + $0x6d8] sm:$0xff]
  %v248 = vld [vmem:[%s1 + $0x6e0] sm:$0xff]
  %v249 = vld [vmem:[%s1 + $0x6e8] sm:$0xff]
  %v250 = vld [vmem:[%s1 + $0x6f0] sm:$0xff]
  %v251 = vld [vmem:[%s1 + $0x6f8] sm:$0xff]
  %v252 = vld [vmem:[%s1 + $0x700] sm:$0xff]
  %v253 = vld [vmem:[%s1 + $0x708] sm:$0xff]
  %v254 = vld [vmem:[%s1 + $0x710] sm:$0xff]
  %v255 = vld [vmem:[%s1 + $0x718] sm:$0xff]
  %v256 = vld [vmem:[%s1 + $0x720] sm:$0xff]
  %v257 = vld [vmem:[%s1 + $0x728] sm:$0xff]
  %v258 = vld [vmem:[%s1 + $0x730] sm:$0xff]
  %v259 = vld [vmem:[%s1 + $0x738] sm:$0xff]
  %v260 = vld [vmem:[%s1 + $0x740] sm:$0xff]
  %v261 = vld [vmem:[%s1 + $0x748] sm:$0xff]
  %v262 = vld [vmem:[%s1 + $0x750] sm:$0xff]
  %v263 = vld [vmem:[%s1 + $0x758] sm:$0xff]
  %v264 = vld [vmem:[%s1 + $0x760] sm:$0xff]
  %v265 = vld [vmem:[%s1 + $0x768] sm:$0xff]
  %v266 = vld [vmem:[%s1 + $0x770] sm:$0xff]
  %v267 = vld [vmem:[%s1 + $0x778] sm:$0xff]
  %v268 = vld [vmem:[%s1 + $0x780] sm:$0xff]
  %v269 = vld [vmem:[%s1 + $0x788] sm:$0xff]
  %v270 = vld [vmem:[%s1 + $0x790] sm:$0xff]
  %v271 = vld [vmem:[%s1 + $0x798] sm:$0xff]
  %v272 = vld [vmem:[%s1 + $0x7a0] sm:$0xff]
  %v273 = vld [vmem:[%s1 + $0x7a8] sm:$0xff]
  %v274 = vld [vmem:[%s1 + $0x7b0] sm:$0xff]
  %v275 = vld [vmem:[%s1 + $0x7b8] sm:$0xff]
  %v276 = vld [vmem:[%s1 + $0x7c0] sm:$0xff]
  %v277 = vld [vmem:[%s1 + $0x7c8] sm:$0xff]
  %v278 = vld [vmem:[%s1 + $0x7d0] sm:$0xff]
  %v279 = vld [vmem:[%s1 + $0x7d8] sm:$0xff]
  %v280 = vld [vmem:[%s1 + $0x7e0] sm:$0xff]
  %v281 = vld [vmem:[%s1 + $0x7e8] sm:$0xff]
  %v282 = vld [vmem:[%s1 + $0x7f0] sm:$0xff]
  %v283 = vld [vmem:[%s1 + $0x7f8] sm:$0xff]
  %v284 = vld [vmem:[%s2] sm:$0x3]
  %v286 = vlaneseq
  %v287 = vshrl.u32 %v286, 7
  %v288 = vsub.s32 0, %v287
  %v289 = vrot.slane %v284, %v288
  %v290 = vlaneseq
  %v291 = vshrl.u32 %v290, 7
  %v292 = vsub.s32 1, %v291
  %v293 = vrot.slane %v284, %v292
  %296 = vmatprep.subr.mxu0 %v59
  %297 = vmatpush1.msra.mxu0 %v58
  %298 = vmatprep.subr.mxu0 %v57
  %299 = vmatpush1.msra.mxu0 %v56
  %300 = vmatprep.subr.mxu0 %v55
  %301 = vmatpush1.msra.mxu0 %v54
  %302 = vmatprep.subr.mxu0 %v53
  %303 = vmatpush1.msra.mxu0 %v52
  %304 = vmatprep.subr.mxu0 %v51
  %305 = vmatpush1.msra.mxu0 %v50
  %306 = vmatprep.subr.mxu0 %v49
  %307 = vmatpush1.msra.mxu0 %v48
  %308 = vmatprep.subr.mxu0 %v47
  %309 = vmatpush1.msra.mxu0 %v46
  %310 = vmatprep.subr.mxu0 %v45
  %311 = vmatpush1.msra.mxu0 %v44
  %312 = vmatprep.subr.mxu0 %v43
  %313 = vmatpush1.msra.mxu0 %v42
  %314 = vmatprep.subr.mxu0 %v41
  %315 = vmatpush1.msra.mxu0 %v40
  %316 = vmatprep.subr.mxu0 %v39
  %317 = vmatpush1.msra.mxu0 %v38
  %318 = vmatprep.subr.mxu0 %v37
  %319 = vmatpush1.msra.mxu0 %v36
  %320 = vmatprep.subr.mxu0 %v35
  %321 = vmatpush1.msra.mxu0 %v34
  %322 = vmatprep.subr.mxu0 %v33
  %323 = vmatpush1.msra.mxu0 %v32
  %324 = vmatprep.subr.mxu0 %v31
  %325 = vmatpush1.msra.mxu0 %v30
  %326 = vmatprep.subr.mxu0 %v29
  %327 = vmatpush1.msra.mxu0 %v28
  %328 = vmatprep.subr.mxu0 %v91
  %329 = vmatpush2.msra.mxu0 %v90
  %330 = vmatprep.subr.mxu0 %v89
  %331 = vmatpush2.msra.mxu0 %v88
  %332 = vmatprep.subr.mxu0 %v87
  %333 = vmatpush2.msra.mxu0 %v86
  %334 = vmatprep.subr.mxu0 %v85
  %335 = vmatpush2.msra.mxu0 %v84
  %336 = vmatprep.subr.mxu0 %v83
  %337 = vmatpush2.msra.mxu0 %v82
  %338 = vmatprep.subr.mxu0 %v81
  %339 = vmatpush2.msra.mxu0 %v80
  %340 = vmatprep.subr.mxu0 %v79
  %341 = vmatpush2.msra.mxu0 %v78
  %342 = vmatprep.subr.mxu0 %v77
  %343 = vmatpush2.msra.mxu0 %v76
  %344 = vmatprep.subr.mxu0 %v75
  %345 = vmatpush2.msra.mxu0 %v74
  %346 = vmatprep.subr.mxu0 %v73
  %347 = vmatpush2.msra.mxu0 %v72
  %348 = vmatprep.subr.mxu0 %v71
  %349 = vmatpush2.msra.mxu0 %v70
  %350 = vmatprep.subr.mxu0 %v69
  %351 = vmatpush2.msra.mxu0 %v68
  %352 = vmatprep.subr.mxu0 %v67
  %353 = vmatpush2.msra.mxu0 %v66
  %354 = vmatprep.subr.mxu0 %v65
  %355 = vmatpush2.msra.mxu0 %v64
  %356 = vmatprep.subr.mxu0 %v63
  %357 = vmatpush2.msra.mxu0 %v62
  %358 = vmatprep.subr.mxu0 %v61
  %359 = vmatpush2.msra.mxu0 %v60
  %360 = vmatprep.mubr.f32.mxu0 %v21
  %361 = vmatmul.mubr.f32.gmra.mxu0 %v20
  %v362 = vpop.f32.mrf.mxu0
  %v363 = vadd.f32 %v289, %v362
  %v364 = vpop.f32.mrf.mxu0
  %v365 = vadd.f32 %v293, %v364
  %366 = vdwg.mxu0
  %367 = vmatprep.subr.mxu0 %v123
  %368 = vmatpush1.msra.mxu0 %v122
  %369 = vmatprep.subr.mxu0 %v121
  %370 = vmatpush1.msra.mxu0 %v120
  %371 = vmatprep.subr.mxu0 %v119
  %372 = vmatpush1.msra.mxu0 %v118
  %373 = vmatprep.subr.mxu0 %v117
  %374 = vmatpush1.msra.mxu0 %v116
  %375 = vmatprep.subr.mxu0 %v115
  %376 = vmatpush1.msra.mxu0 %v114
  %377 = vmatprep.subr.mxu0 %v113
  %378 = vmatpush1.msra.mxu0 %v112
  %379 = vmatprep.subr.mxu0 %v111
  %380 = vmatpush1.msra.mxu0 %v110
  %381 = vmatprep.subr.mxu0 %v109
  %382 = vmatpush1.msra.mxu0 %v108
  %383 = vmatprep.subr.mxu0 %v107
  %384 = vmatpush1.msra.mxu0 %v106
  %385 = vmatprep.subr.mxu0 %v105
  %386 = vmatpush1.msra.mxu0 %v104
  %387 = vmatprep.subr.mxu0 %v103
  %388 = vmatpush1.msra.mxu0 %v102
  %389 = vmatprep.subr.mxu0 %v101
  %390 = vmatpush1.msra.mxu0 %v100
  %391 = vmatprep.subr.mxu0 %v99
  %392 = vmatpush1.msra.mxu0 %v98
  %393 = vmatprep.subr.mxu0 %v97
  %394 = vmatpush1.msra.mxu0 %v96
  %395 = vmatprep.subr.mxu0 %v95
  %396 = vmatpush1.msra.mxu0 %v94
  %397 = vmatprep.subr.mxu0 %v93
  %398 = vmatpush1.msra.mxu0 %v92
  %399 = vmatprep.subr.mxu0 %v155
  %400 = vmatpush2.msra.mxu0 %v154
  %401 = vmatprep.subr.mxu0 %v153
  %402 = vmatpush2.msra.mxu0 %v152
  %403 = vmatprep.subr.mxu0 %v151
  %404 = vmatpush2.msra.mxu0 %v150
  %405 = vmatprep.subr.mxu0 %v149
  %406 = vmatpush2.msra.mxu0 %v148
  %407 = vmatprep.subr.mxu0 %v147
  %408 = vmatpush2.msra.mxu0 %v146
  %409 = vmatprep.subr.mxu0 %v145
  %410 = vmatpush2.msra.mxu0 %v144
  %411 = vmatprep.subr.mxu0 %v143
  %412 = vmatpush2.msra.mxu0 %v142
  %413 = vmatprep.subr.mxu0 %v141
  %414 = vmatpush2.msra.mxu0 %v140
  %415 = vmatprep.subr.mxu0 %v139
  %416 = vmatpush2.msra.mxu0 %v138
  %417 = vmatprep.subr.mxu0 %v137
  %418 = vmatpush2.msra.mxu0 %v136
  %419 = vmatprep.subr.mxu0 %v135
  %420 = vmatpush2.msra.mxu0 %v134
  %421 = vmatprep.subr.mxu0 %v133
  %422 = vmatpush2.msra.mxu0 %v132
  %423 = vmatprep.subr.mxu0 %v131
  %424 = vmatpush2.msra.mxu0 %v130
  %425 = vmatprep.subr.mxu0 %v129
  %426 = vmatpush2.msra.mxu0 %v128
  %427 = vmatprep.subr.mxu0 %v127
  %428 = vmatpush2.msra.mxu0 %v126
  %429 = vmatprep.subr.mxu0 %v125
  %430 = vmatpush2.msra.mxu0 %v124
  %431 = vmatprep.mubr.f32.mxu0 %v23
  %432 = vmatmul.mubr.f32.gmra.mxu0 %v22
  %v433 = vpop.f32.mrf.mxu0
  %v434 = vadd.f32 %v363, %v433
  %v435 = vpop.f32.mrf.mxu0
  %v436 = vadd.f32 %v365, %v435
  %437 = vdwg.mxu0
  %438 = vmatprep.subr.mxu0 %v187
  %439 = vmatpush1.msra.mxu0 %v186
  %440 = vmatprep.subr.mxu0 %v185
  %441 = vmatpush1.msra.mxu0 %v184
  %442 = vmatprep.subr.mxu0 %v183
  %443 = vmatpush1.msra.mxu0 %v182
  %444 = vmatprep.subr.mxu0 %v181
  %445 = vmatpush1.msra.mxu0 %v180
  %446 = vmatprep.subr.mxu0 %v179
  %447 = vmatpush1.msra.mxu0 %v178
  %448 = vmatprep.subr.mxu0 %v177
  %449 = vmatpush1.msra.mxu0 %v176
  %450 = vmatprep.subr.mxu0 %v175
  %451 = vmatpush1.msra.mxu0 %v174
  %452 = vmatprep.subr.mxu0 %v173
  %453 = vmatpush1.msra.mxu0 %v172
  %454 = vmatprep.subr.mxu0 %v171
  %455 = vmatpush1.msra.mxu0 %v170
  %456 = vmatprep.subr.mxu0 %v169
  %457 = vmatpush1.msra.mxu0 %v168
  %458 = vmatprep.subr.mxu0 %v167
  %459 = vmatpush1.msra.mxu0 %v166
  %460 = vmatprep.subr.mxu0 %v165
  %461 = vmatpush1.msra.mxu0 %v164
  %462 = vmatprep.subr.mxu0 %v163
  %463 = vmatpush1.msra.mxu0 %v162
  %464 = vmatprep.subr.mxu0 %v161
  %465 = vmatpush1.msra.mxu0 %v160
  %466 = vmatprep.subr.mxu0 %v159
  %467 = vmatpush1.msra.mxu0 %v158
  %468 = vmatprep.subr.mxu0 %v157
  %469 = vmatpush1.msra.mxu0 %v156
  %470 = vmatprep.subr.mxu0 %v219
  %471 = vmatpush2.msra.mxu0 %v218
  %472 = vmatprep.subr.mxu0 %v217
  %473 = vmatpush2.msra.mxu0 %v216
  %474 = vmatprep.subr.mxu0 %v215
  %475 = vmatpush2.msra.mxu0 %v214
  %476 = vmatprep.subr.mxu0 %v213
  %477 = vmatpush2.msra.mxu0 %v212
  %478 = vmatprep.subr.mxu0 %v211
  %479 = vmatpush2.msra.mxu0 %v210
  %480 = vmatprep.subr.mxu0 %v209
  %481 = vmatpush2.msra.mxu0 %v208
  %482 = vmatprep.subr.mxu0 %v207
  %483 = vmatpush2.msra.mxu0 %v206
  %484 = vmatprep.subr.mxu0 %v205
  %485 = vmatpush2.msra.mxu0 %v204
  %486 = vmatprep.subr.mxu0 %v203
  %487 = vmatpush2.msra.mxu0 %v202
  %488 = vmatprep.subr.mxu0 %v201
  %489 = vmatpush2.msra.mxu0 %v200
  %490 = vmatprep.subr.mxu0 %v199
  %491 = vmatpush2.msra.mxu0 %v198
  %492 = vmatprep.subr.mxu0 %v197
  %493 = vmatpush2.msra.mxu0 %v196
  %494 = vmatprep.subr.mxu0 %v195
  %495 = vmatpush2.msra.mxu0 %v194
  %496 = vmatprep.subr.mxu0 %v193
  %497 = vmatpush2.msra.mxu0 %v192
  %498 = vmatprep.subr.mxu0 %v191
  %499 = vmatpush2.msra.mxu0 %v190
  %500 = vmatprep.subr.mxu0 %v189
  %501 = vmatpush2.msra.mxu0 %v188
  %502 = vmatprep.mubr.f32.mxu0 %v25
  %503 = vmatmul.mubr.f32.gmra.mxu0 %v24
  %v504 = vpop.f32.mrf.mxu0
  %v505 = vadd.f32 %v434, %v504
  %v506 = vpop.f32.mrf.mxu0
  %v507 = vadd.f32 %v436, %v506
  %508 = vdwg.mxu0
  %509 = vmatprep.subr.mxu0 %v251
  %510 = vmatpush1.msra.mxu0 %v250
  %511 = vmatprep.subr.mxu0 %v249
  %512 = vmatpush1.msra.mxu0 %v248
  %513 = vmatprep.subr.mxu0 %v247
  %514 = vmatpush1.msra.mxu0 %v246
  %515 = vmatprep.subr.mxu0 %v245
  %516 = vmatpush1.msra.mxu0 %v244
  %517 = vmatprep.subr.mxu0 %v243
  %518 = vmatpush1.msra.mxu0 %v242
  %519 = vmatprep.subr.mxu0 %v241
  %520 = vmatpush1.msra.mxu0 %v240
  %521 = vmatprep.subr.mxu0 %v239
  %522 = vmatpush1.msra.mxu0 %v238
  %523 = vmatprep.subr.mxu0 %v237
  %524 = vmatpush1.msra.mxu0 %v236
  %525 = vmatprep.subr.mxu0 %v235
  %526 = vmatpush1.msra.mxu0 %v234
  %527 = vmatprep.subr.mxu0 %v233
  %528 = vmatpush1.msra.mxu0 %v232
  %529 = vmatprep.subr.mxu0 %v231
  %530 = vmatpush1.msra.mxu0 %v230
  %531 = vmatprep.subr.mxu0 %v229
  %532 = vmatpush1.msra.mxu0 %v228
  %533 = vmatprep.subr.mxu0 %v227
  %534 = vmatpush1.msra.mxu0 %v226
  %535 = vmatprep.subr.mxu0 %v225
  %536 = vmatpush1.msra.mxu0 %v224
  %537 = vmatprep.subr.mxu0 %v223
  %538 = vmatpush1.msra.mxu0 %v222
  %539 = vmatprep.subr.mxu0 %v221
  %540 = vmatpush1.msra.mxu0 %v220
  %541 = vmatprep.subr.mxu0 %v283
  %542 = vmatpush2.msra.mxu0 %v282
  %543 = vmatprep.subr.mxu0 %v281
  %544 = vmatpush2.msra.mxu0 %v280
  %545 = vmatprep.subr.mxu0 %v279
  %546 = vmatpush2.msra.mxu0 %v278
  %547 = vmatprep.subr.mxu0 %v277
  %548 = vmatpush2.msra.mxu0 %v276
  %549 = vmatprep.subr.mxu0 %v275
  %550 = vmatpush2.msra.mxu0 %v274
  %551 = vmatprep.subr.mxu0 %v273
  %552 = vmatpush2.msra.mxu0 %v272
  %553 = vmatprep.subr.mxu0 %v271
  %554 = vmatpush2.msra.mxu0 %v270
  %555 = vmatprep.subr.mxu0 %v269
  %556 = vmatpush2.msra.mxu0 %v268
  %557 = vmatprep.subr.mxu0 %v267
  %558 = vmatpush2.msra.mxu0 %v266
  %559 = vmatprep.subr.mxu0 %v265
  %560 = vmatpush2.msra.mxu0 %v264
  %561 = vmatprep.subr.mxu0 %v263
  %562 = vmatpush2.msra.mxu0 %v262
  %563 = vmatprep.subr.mxu0 %v261
  %564 = vmatpush2.msra.mxu0 %v260
  %565 = vmatprep.subr.mxu0 %v259
  %566 = vmatpush2.msra.mxu0 %v258
  %567 = vmatprep.subr.mxu0 %v257
  %568 = vmatpush2.msra.mxu0 %v256
  %569 = vmatprep.subr.mxu0 %v255
  %570 = vmatpush2.msra.mxu0 %v254
  %571 = vmatprep.subr.mxu0 %v253
  %572 = vmatpush2.msra.mxu0 %v252
  %573 = vmatprep.mubr.f32.mxu0 %v27
  %574 = vmatmul.mubr.f32.gmra.mxu0 %v26
  %v575 = vpop.f32.mrf.mxu0
  %v576 = vadd.f32 %v505, %v575
  %v577 = vpop.f32.mrf.mxu0
  %v578 = vadd.f32 %v507, %v577
  %579 = vdwg.mxu0
  %vm580 = vcmp.ge.f32.partialorder %v576, 0.0
  %vm581 = vcmp.ge.f32.partialorder %v578, 0.0
  %v582 = vmul.f32 %v576, 0.01
  %v583 = vmul.f32 %v578, 0.01
  %v584 = vsel %vm580, %v576, %v582
  %v585 = vsel %vm581, %v578, %v583
  %v586 = vld [vmem:[%s3] sm:$0xff]
  %v587 = vld [vmem:[%s3 + $0x8] sm:$0xff]
  %v588 = vld [vmem:[%s3 + $0x10] sm:$0xff]
  %v589 = vld [vmem:[%s3 + $0x18] sm:$0xff]
  %v590 = vld [vmem:[%s3 + $0x20] sm:$0xff]
  %v591 = vld [vmem:[%s3 + $0x28] sm:$0xff]
  %v592 = vld [vmem:[%s3 + $0x30] sm:$0xff]
  %v593 = vld [vmem:[%s3 + $0x38] sm:$0xff]
  %v594 = vld [vmem:[%s3 + $0x40] sm:$0xff]
  %v595 = vld [vmem:[%s3 + $0x48] sm:$0xff]
  %v596 = vld [vmem:[%s3 + $0x50] sm:$0xff]
  %v597 = vld [vmem:[%s3 + $0x58] sm:$0xff]
  %v598 = vld [vmem:[%s3 + $0x60] sm:$0xff]
  %v599 = vld [vmem:[%s3 + $0x68] sm:$0xff]
  %v600 = vld [vmem:[%s3 + $0x70] sm:$0xff]
  %v601 = vld [vmem:[%s3 + $0x78] sm:$0xff]
  %v602 = vld [vmem:[%s3 + $0x80] sm:$0xff]
  %v603 = vld [vmem:[%s3 + $0x88] sm:$0xff]
  %v604 = vld [vmem:[%s3 + $0x90] sm:$0xff]
  %v605 = vld [vmem:[%s3 + $0x98] sm:$0xff]
  %v606 = vld [vmem:[%s3 + $0xa0] sm:$0xff]
  %v607 = vld [vmem:[%s3 + $0xa8] sm:$0xff]
  %v608 = vld [vmem:[%s3 + $0xb0] sm:$0xff]
  %v609 = vld [vmem:[%s3 + $0xb8] sm:$0xff]
  %v610 = vld [vmem:[%s3 + $0xc0] sm:$0xff]
  %v611 = vld [vmem:[%s3 + $0xc8] sm:$0xff]
  %v612 = vld [vmem:[%s3 + $0xd0] sm:$0xff]
  %v613 = vld [vmem:[%s3 + $0xd8] sm:$0xff]
  %v614 = vld [vmem:[%s3 + $0xe0] sm:$0xff]
  %v615 = vld [vmem:[%s3 + $0xe8] sm:$0xff]
  %v616 = vld [vmem:[%s3 + $0xf0] sm:$0xff]
  %v617 = vld [vmem:[%s3 + $0xf8] sm:$0xff]
  %v618 = vld [vmem:[%s4] sm:$0x1]
  %v620 = vlaneseq
  %v621 = vshrl.u32 %v620, 7
  %v622 = vsub.s32 0, %v621
  %v623 = vrot.slane %v618, %v622
  %625 = vmatprep.subr.mxu0 0.0
  %626 = vmatpush1.msra.mxu0 %v601
  %627 = vmatprep.subr.mxu0 0.0
  %628 = vmatpush1.msra.mxu0 %v600
  %629 = vmatprep.subr.mxu0 0.0
  %630 = vmatpush1.msra.mxu0 %v599
  %631 = vmatprep.subr.mxu0 0.0
  %632 = vmatpush1.msra.mxu0 %v598
  %633 = vmatprep.subr.mxu0 0.0
  %634 = vmatpush1.msra.mxu0 %v597
  %635 = vmatprep.subr.mxu0 0.0
  %636 = vmatpush1.msra.mxu0 %v596
  %637 = vmatprep.subr.mxu0 0.0
  %638 = vmatpush1.msra.mxu0 %v595
  %639 = vmatprep.subr.mxu0 0.0
  %640 = vmatpush1.msra.mxu0 %v594
  %641 = vmatprep.subr.mxu0 0.0
  %642 = vmatpush1.msra.mxu0 %v593
  %643 = vmatprep.subr.mxu0 0.0
  %644 = vmatpush1.msra.mxu0 %v592
  %645 = vmatprep.subr.mxu0 0.0
  %646 = vmatpush1.msra.mxu0 %v591
  %647 = vmatprep.subr.mxu0 0.0
  %648 = vmatpush1.msra.mxu0 %v590
  %649 = vmatprep.subr.mxu0 0.0
  %650 = vmatpush1.msra.mxu0 %v589
  %651 = vmatprep.subr.mxu0 0.0
  %652 = vmatpush1.msra.mxu0 %v588
  %653 = vmatprep.subr.mxu0 0.0
  %654 = vmatpush1.msra.mxu0 %v587
  %655 = vmatprep.subr.mxu0 0.0
  %656 = vmatpush1.msra.mxu0 %v586
  %657 = vmatprep.subr.mxu0 0.0
  %658 = vmatpush2.msra.mxu0 %v617
  %659 = vmatprep.subr.mxu0 0.0
  %660 = vmatpush2.msra.mxu0 %v616
  %661 = vmatprep.subr.mxu0 0.0
  %662 = vmatpush2.msra.mxu0 %v615
  %663 = vmatprep.subr.mxu0 0.0
  %664 = vmatpush2.msra.mxu0 %v614
  %665 = vmatprep.subr.mxu0 0.0
  %666 = vmatpush2.msra.mxu0 %v613
  %667 = vmatprep.subr.mxu0 0.0
  %668 = vmatpush2.msra.mxu0 %v612
  %669 = vmatprep.subr.mxu0 0.0
  %670 = vmatpush2.msra.mxu0 %v611
  %671 = vmatprep.subr.mxu0 0.0
  %672 = vmatpush2.msra.mxu0 %v610
  %673 = vmatprep.subr.mxu0 0.0
  %674 = vmatpush2.msra.mxu0 %v609
  %675 = vmatprep.subr.mxu0 0.0
  %676 = vmatpush2.msra.mxu0 %v608
  %677 = vmatprep.subr.mxu0 0.0
  %678 = vmatpush2.msra.mxu0 %v607
  %679 = vmatprep.subr.mxu0 0.0
  %680 = vmatpush2.msra.mxu0 %v606
  %681 = vmatprep.subr.mxu0 0.0
  %682 = vmatpush2.msra.mxu0 %v605
  %683 = vmatprep.subr.mxu0 0.0
  %684 = vmatpush2.msra.mxu0 %v604
  %685 = vmatprep.subr.mxu0 0.0
  %686 = vmatpush2.msra.mxu0 %v603
  %687 = vmatprep.subr.mxu0 0.0
  %688 = vmatpush2.msra.mxu0 %v602
  %689 = vmatprep.mubr.f32.mxu0 %v585
  %690 = vmatmul.mubr.f32.gmra.mxu0 %v584
  %v691 = vpop.f32.mrf.mxu0
  %v692 = vadd.f32 %v623, %v691
  %v693 = vpop.f32.mrf.mxu0
  %694 = vdwg.mxu0
  %695 = vst [vmem:[%s5] sm:$0xff] %v692
  // Predicated region
  $region22: #{_lambda_.3} parent=0 // pred_check
    _
  $region23: #{_lambda_.3} parent=0 // pred_check_branch
    %697 = sbr.rel (0) target = $region25
  $region24: #{_lambda_.3} parent=0 // pred_region
    _
  $region25: #{_lambda_.3} parent=0 // pred_fallthru
    _
  // Predicated region
  $region26: #{_lambda_.3} parent=0 // pred_check
    _
  $region27: #{_lambda_.3} parent=0 // pred_check_branch
    %699 = sbr.rel (0) target = $region29
  $region28: #{_lambda_.3} parent=0 // pred_region
    _
  $region29: #{_lambda_.3} parent=0 // pred_fallthru
    _

</llo_original>
